<compile_context>
chip_gen: v7x
topology: tpu7x:2x2x1
jax: 0.10.0
libtpu: 0.0.40
codegen_flags: <defaults>
</compile_context>

<pallas_src>
import math
import functools

import jax
import jax.numpy as jnp
from jax import lax
from jax.experimental import pallas as pl
from jax.experimental.pallas import tpu as pltpu


# --------------------------- generation-aware VMEM -------------------------- #

@functools.lru_cache(maxsize=None)
def vmem_limit_bytes():
    """~85% of physical VMEM, capped at 110 MiB (v5e/v6e: 128 MiB, v7x: 64 MiB)."""
    cap = 64 * 1024 * 1024
    try:
        info = pltpu.get_tpu_info()
        cap = int(info.vmem_capacity_bytes)
    except Exception:
        pass
    return max(32 * 1024 * 1024, min(int(cap * 0.85), 110 * 1024 * 1024))


def _cparams(dim_sems):
    return pltpu.CompilerParams(dimension_semantics=dim_sems,
                                vmem_limit_bytes=vmem_limit_bytes())


def _pick_block(dim, preferred, align):
    """Largest block <= preferred that divides `dim` and is `align`-aligned, else full dim."""
    if dim <= preferred:
        return dim
    b = (preferred // align) * align
    while b >= align:
        if dim % b == 0:
            return b
        b -= align
    return dim


# ----------------------------- Pallas kernels ------------------------------ #

def _qkv_proj_kernel(x_ref, w_ref, b_ref, o_ref, acc_ref):
    """Head-major qkv projection for one (batch, head) pair, K-tiled accumulation."""
    @pl.when(pl.program_id(2) == 0)
    def _():
        acc_ref[...] = jnp.zeros_like(acc_ref)

    acc_ref[...] += jnp.dot(x_ref[0], w_ref[0], preferred_element_type=jnp.float32)

    @pl.when(pl.program_id(2) == pl.num_programs(2) - 1)
    def _():
        o_ref[0, 0] = (acc_ref[...] + b_ref[0]).astype(o_ref.dtype)


def qkv_projection(x, w, b, tk=512):
    """x: [B,S,E] bf16 @ w: [nhead,E,3hd] bf16 + b: [nhead,1,3hd] f32 -> [B,nhead,S,3hd] bf16."""
    B, S, E = x.shape
    nhead, _, hd3 = w.shape
    tk = _pick_block(E, tk, 128)
    return pl.pallas_call(
        _qkv_proj_kernel,
        grid=(B, nhead, E // tk),
        in_specs=[
            pl.BlockSpec((1, S, tk), lambda b_, h, k: (b_, 0, k)),
            pl.BlockSpec((1, tk, hd3), lambda b_, h, k: (h, k, 0)),
            pl.BlockSpec((1, 1, hd3), lambda b_, h, k: (h, 0, 0)),
        ],
        out_specs=pl.BlockSpec((1, 1, S, hd3), lambda b_, h, k: (b_, h, 0, 0)),
        out_shape=jax.ShapeDtypeStruct((B, nhead, S, hd3), jnp.bfloat16),
        scratch_shapes=[pltpu.VMEM((S, hd3), jnp.float32)],
        compiler_params=_cparams(("parallel", "parallel", "arbitrary")),
    )(x, w, b)


def _attention_kernel(qkv_ref, m_ref, o_ref, *, hd, scale):
    """One (batch, head) per grid step. qkv block: (1, 1, S, 3*hd) = [q | k | v]."""
    qkv = qkv_ref[0, 0]                       # (S, 3hd) bf16
    q = qkv[:, :hd]
    k = qkv[:, hd:2 * hd]
    v = qkv[:, 2 * hd:]
    # Contract dim 1 of both operands: no explicit K transpose relayout.
    s = lax.dot_general(q, k, (((1,), (1,)), ((), ())),
                        preferred_element_type=jnp.float32)
    s = s * scale + m_ref[...]
    s = s - jnp.max(s, axis=-1, keepdims=True)
    p = jnp.exp(s)
    p = p * pl.reciprocal(jnp.sum(p, axis=-1, keepdims=True), approx=True)
    o_ref[0, 0] = jnp.dot(p.astype(jnp.bfloat16), v,
                          preferred_element_type=jnp.float32).astype(o_ref.dtype)


def mha_attention(qkv, mask, scale):
    """qkv: [B,nhead,S,3hd] bf16, mask: [S,S] f32 additive -> [B,nhead,S,hd] bf16."""
    B, nhead, S, hd3 = qkv.shape
    hd = hd3 // 3
    return pl.pallas_call(
        functools.partial(_attention_kernel, hd=hd, scale=scale),
        grid=(B, nhead),
        in_specs=[
            pl.BlockSpec((1, 1, S, hd3), lambda b_, h: (b_, h, 0, 0)),
            pl.BlockSpec((S, S), lambda b_, h: (0, 0)),
        ],
        out_specs=pl.BlockSpec((1, 1, S, hd), lambda b_, h: (b_, h, 0, 0)),
        out_shape=jax.ShapeDtypeStruct((B, nhead, S, hd), jnp.bfloat16),
        compiler_params=_cparams(("parallel", "parallel")),
    )(qkv, mask)


def _proj_add_ln_kernel(a_ref, w_ref, b_ref, r_ref, g_ref, bb_ref, o_ref, acc_ref, *, eps):
    """out_proj as a head-contraction (MXU recombines heads) + residual + LayerNorm."""
    h = pl.program_id(2)

    @pl.when(h == 0)
    def _():
        acc_ref[...] = jnp.zeros_like(acc_ref)

    acc_ref[...] += jnp.dot(a_ref[0, 0], w_ref[0], preferred_element_type=jnp.float32)

    @pl.when(h == pl.num_programs(2) - 1)
    def _():
        y = acc_ref[...] + b_ref[...] + r_ref[0].astype(jnp.float32)
        mean = jnp.mean(y, axis=-1, keepdims=True)
        c = y - mean
        var = jnp.mean(c * c, axis=-1, keepdims=True)
        o_ref[0] = (c * lax.rsqrt(var + eps) * g_ref[...] + bb_ref[...]).astype(o_ref.dtype)


def proj_add_layernorm(attn, w, b, res, gamma, beta, eps=1e-5, ts=256):
    """attn: [B,nhead,S,hd] bf16, w: [nhead,hd,E] bf16, res: [B,S,E] bf16 -> [B,S,E] bf16."""
    B, nhead, S, hd = attn.shape
    E = w.shape[2]
    ts = _pick_block(S, ts, 8)
    return pl.pallas_call(
        functools.partial(_proj_add_ln_kernel, eps=eps),
        grid=(B, S // ts, nhead),
        in_specs=[
            pl.BlockSpec((1, 1, ts, hd), lambda b_, i, h: (b_, h, i, 0)),
            pl.BlockSpec((1, hd, E), lambda b_, i, h: (h, 0, 0)),
            pl.BlockSpec((1, E), lambda b_, i, h: (0, 0)),
            pl.BlockSpec((1, ts, E), lambda b_, i, h: (b_, i, 0)),
            pl.BlockSpec((1, E), lambda b_, i, h: (0, 0)),
            pl.BlockSpec((1, E), lambda b_, i, h: (0, 0)),
        ],
        out_specs=pl.BlockSpec((1, ts, E), lambda b_, i, h: (b_, i, 0)),
        out_shape=jax.ShapeDtypeStruct((B, S, E), jnp.bfloat16),
        scratch_shapes=[pltpu.VMEM((ts, E), jnp.float32)],
        compiler_params=_cparams(("parallel", "parallel", "arbitrary")),
    )(attn, w, b.reshape(1, E), res, gamma.reshape(1, E), beta.reshape(1, E))


def _ffn_ln_kernel(x_ref, w1_ref, b1_ref, w2_ref, b2_ref, g_ref, bb_ref, o_ref, acc_ref, *, eps):
    """Fused FFN: LayerNorm(x + lin2(relu(lin1(x)))), tiled over the d_hid contraction."""
    k = pl.program_id(2)
    x = x_ref[0]                                           # (ts, E) bf16

    @pl.when(k == 0)
    def _():
        acc_ref[...] = jnp.zeros_like(acc_ref)

    h = jnp.dot(x, w1_ref[...], preferred_element_type=jnp.float32) + b1_ref[...]
    h = jnp.maximum(h, 0.0)
    acc_ref[...] += jnp.dot(h.astype(jnp.bfloat16), w2_ref[...],
                            preferred_element_type=jnp.float32)

    @pl.when(k == pl.num_programs(2) - 1)
    def _():
        y = acc_ref[...] + b2_ref[...] + x.astype(jnp.float32)
        mean = jnp.mean(y, axis=-1, keepdims=True)
        c = y - mean
        var = jnp.mean(c * c, axis=-1, keepdims=True)
        o_ref[0] = (c * lax.rsqrt(var + eps) * g_ref[...] + bb_ref[...]).astype(o_ref.dtype)


def ffn_layernorm(x, w1, b1, w2, b2, gamma, beta, eps=1e-5, ts=256, th=512):
    """x: [B,S,E] bf16, w1: [E,H] bf16, w2: [H,E] bf16 -> [B,S,E] bf16."""
    B, S, E = x.shape
    H = w1.shape[1]
    ts = _pick_block(S, ts, 8)
    th = _pick_block(H, th, 128)
    return pl.pallas_call(
        functools.partial(_ffn_ln_kernel, eps=eps),
        grid=(B, S // ts, H // th),
        in_specs=[
            pl.BlockSpec((1, ts, E), lambda b_, i, k: (b_, i, 0)),
            pl.BlockSpec((E, th), lambda b_, i, k: (0, k)),
            pl.BlockSpec((1, th), lambda b_, i, k: (0, k)),
            pl.BlockSpec((th, E), lambda b_, i, k: (k, 0)),
            pl.BlockSpec((1, E), lambda b_, i, k: (0, 0)),
            pl.BlockSpec((1, E), lambda b_, i, k: (0, 0)),
            pl.BlockSpec((1, E), lambda b_, i, k: (0, 0)),
        ],
        out_specs=pl.BlockSpec((1, ts, E), lambda b_, i, k: (b_, i, 0)),
        out_shape=jax.ShapeDtypeStruct((B, S, E), jnp.bfloat16),
        scratch_shapes=[pltpu.VMEM((ts, E), jnp.float32)],
        compiler_params=_cparams(("parallel", "parallel", "arbitrary")),
    )(x, w1, b1.reshape(1, H), w2, b2.reshape(1, E),
      gamma.reshape(1, E), beta.reshape(1, E))


def _matmul_bias_kernel(x_ref, w_ref, b_ref, o_ref, acc_ref):
    @pl.when(pl.program_id(2) == 0)
    def _():
        acc_ref[...] = jnp.zeros_like(acc_ref)

    acc_ref[...] += jnp.dot(x_ref[...], w_ref[...], preferred_element_type=jnp.float32)

    @pl.when(pl.program_id(2) == pl.num_programs(2) - 1)
    def _():
        o_ref[...] = (acc_ref[...] + b_ref[...]).astype(o_ref.dtype)


def matmul_bias(x, w, b, out_dtype=jnp.float32, tm=256, tn=256, tk=512):
    """x: [M,K] bf16 @ w: [K,N] bf16 + b: [N] f32, tiled over (M, N, K). Used for the decoder."""
    M, K = x.shape
    N = w.shape[1]
    tm = _pick_block(M, tm, 8)
    tn = _pick_block(N, tn, 128)
    tk = _pick_block(K, tk, 128)
    return pl.pallas_call(
        _matmul_bias_kernel,
        grid=(M // tm, N // tn, K // tk),
        in_specs=[
            pl.BlockSpec((tm, tk), lambda i, j, k: (i, k)),
            pl.BlockSpec((tk, tn), lambda i, j, k: (k, j)),
            pl.BlockSpec((1, tn), lambda i, j, k: (0, j)),
        ],
        out_specs=pl.BlockSpec((tm, tn), lambda i, j, k: (i, j)),
        out_shape=jax.ShapeDtypeStruct((M, N), out_dtype),
        scratch_shapes=[pltpu.VMEM((tm, tn), jnp.float32)],
        compiler_params=_cparams(("parallel", "parallel", "arbitrary")),
    )(x, w, b.reshape(1, N))


# ------------------------------ Model (glue) ------------------------------- #

def make_positional_encoding(max_len, d_model):
    position = jnp.arange(max_len, dtype=jnp.float32)[:, None]
    div_term = jnp.exp(
        jnp.arange(0, d_model, 2, dtype=jnp.float32) * (-math.log(10000.0) / d_model)
    )
    pe = jnp.zeros((max_len, 1, d_model), dtype=jnp.float32)
    pe = pe.at[:, 0, 0::2].set(jnp.sin(position * div_term))
    pe = pe.at[:, 0, 1::2].set(jnp.cos(position * div_term))
    return pe


def init_params(key, ntoken, d_model, nhead, d_hid, nlayers, max_len=5000):
    initrange = 0.1
    E = d_model
    hd = E // nhead
    keys = jax.random.split(key, 2 + nlayers)

    def u(k, shape, scale):
        return jax.random.uniform(k, shape, jnp.float32, -scale, scale)

    n_pad = ((ntoken + 127) // 128) * 128                  # lane-dense decoder output
    dec_w = u(keys[1], (d_model, ntoken), initrange)
    dec_w = jnp.pad(dec_w, ((0, 0), (0, n_pad - ntoken)))

    params = {
        "emb": u(keys[0], (ntoken, d_model), initrange),
        "dec_w": dec_w.astype(jnp.bfloat16),
        "dec_b": jnp.zeros((n_pad,), jnp.float32),
        "pe": make_positional_encoding(max_len, d_model),
        "layers": [],
    }
    for l in range(nlayers):
        lk = jax.random.split(keys[2 + l], 4)
        s_e = 1.0 / math.sqrt(E)
        s_h = 1.0 / math.sqrt(d_hid)

        in_w = u(lk[0], (E, 3 * E), s_e)     # cols = [q | k | v], each split by head
        in_b = jnp.zeros((3 * E,), jnp.float32)
        out_w = u(lk[1], (E, E), s_e)        # rows = concat of heads

        params["layers"].append({
            # head-major qkv weight: [nhead, E, 3*hd]; per-head cols = [q_h | k_h | v_h]
            "qkv_w": in_w.reshape(E, 3, nhead, hd).transpose(2, 0, 1, 3)
                         .reshape(nhead, E, 3 * hd).astype(jnp.bfloat16),
            "qkv_b": in_b.reshape(3, nhead, hd).transpose(1, 0, 2)
                         .reshape(nhead, 1, 3 * hd),
            # out-proj weight split per head along its input dim: [nhead, hd, E]
            "out_w": out_w.reshape(nhead, hd, E).astype(jnp.bfloat16),
            "out_b": jnp.zeros((E,), jnp.float32),
            "lin1_w": u(lk[2], (E, d_hid), s_e).astype(jnp.bfloat16),
            "lin1_b": jnp.zeros((d_hid,), jnp.float32),
            "lin2_w": u(lk[3], (d_hid, E), s_h).astype(jnp.bfloat16),
            "lin2_b": jnp.zeros((E,), jnp.float32),
            "ln1_g": jnp.ones((E,), jnp.float32),
            "ln1_b": jnp.zeros((E,), jnp.float32),
            "ln2_g": jnp.ones((E,), jnp.float32),
            "ln2_b": jnp.zeros((E,), jnp.float32),
        })
    return params


def encoder_layer_forward(x_bse, mask, p, scale):
    """Post-norm TransformerEncoderLayer (PyTorch default, ReLU), batch-major bf16."""
    qkv = qkv_projection(x_bse, p["qkv_w"], p["qkv_b"])          # [B,nhead,S,3hd] bf16
    attn = mha_attention(qkv, mask, scale)                       # [B,nhead,S,hd]  bf16
    x1 = proj_add_layernorm(attn, p["out_w"], p["out_b"], x_bse,
                            p["ln1_g"], p["ln1_b"])              # [B,S,E] bf16
    x2 = ffn_layernorm(x1, p["lin1_w"], p["lin1_b"], p["lin2_w"], p["lin2_b"],
                       p["ln2_g"], p["ln2_b"])                   # [B,S,E] bf16
    return x2


@functools.partial(jax.jit, static_argnames=("nhead", "ntoken"))
def transformer_forward(params, src, src_mask, *, nhead, ntoken):
    S, B = src.shape
    E = params["emb"].shape[1]
    hd = E // nhead

    # Embedding gather * sqrt(d_model) + positional encoding + bf16 cast: left to XLA
    # (fuses with the gather) instead of a standalone elementwise pallas_call.
    pe = params["pe"][:S, 0][None]                               # [1, S, E]
    x = (jnp.take(params["emb"], src.T, axis=0) * math.sqrt(E) + pe).astype(jnp.bfloat16)

    scale = 1.0 / math.sqrt(hd)
    for p in params["layers"]:
        x = encoder_layer_forward(x, src_mask, p, scale)

    # back to sequence-major for the decoder (single small bf16 transpose)
    x_sm = x.transpose(1, 0, 2).reshape(S * B, E)                # [S*B, E] bf16
    logits = matmul_bias(x_sm, params["dec_w"], params["dec_b"],
                         out_dtype=jnp.float32)                  # [S*B, n_pad] f32
    n_pad = params["dec_w"].shape[1]
    logits = logits.reshape(S, B, n_pad)
    if n_pad != ntoken:
        logits = logits[:, :, :ntoken]                           # [S, B, ntoken]
    return logits


# ---------------------------------- main ----------------------------------- #

if __name__ == "__main__":
    ntoken, d_model, nhead, d_hid, nlayers = 33, 32, 2, 64, 2
    S, B = 8, 2

    key = jax.random.PRNGKey(0)
    k_param, k_src = jax.random.split(key)
    params = init_params(k_param, ntoken, d_model, nhead, d_hid, nlayers)

    src = jax.random.randint(k_src, (S, B), 0, ntoken, dtype=jnp.int32)
    # causal (square subsequent) additive mask: 0 on/below diag, large negative above
    src_mask = jnp.where(
        jnp.arange(S)[None, :] > jnp.arange(S)[:, None], -1e9, 0.0
    ).astype(jnp.float32)

    out = transformer_forward(params, src, src_mask, nhead=nhead, ntoken=ntoken)
    out = jax.block_until_ready(out)

    assert out.shape == (S, B, ntoken), out.shape
    assert bool(jnp.all(jnp.isfinite(out)))
    print("KERNEL_OK")
</pallas_src>

<mosaic_0001>
module attributes {stable_mosaic.version = 11 : i64} {
  func.func @_qkv_proj_kernel(%arg0: i32, %arg1: i32, %arg2: i32, %arg3: memref<1x8x32xbf16, #tpu.memory_space<vmem>>, %arg4: memref<1x32x48xbf16, #tpu.memory_space<vmem>>, %arg5: memref<1x1x48xf32, #tpu.memory_space<vmem>>, %arg6: memref<1x1x8x48xbf16, #tpu.memory_space<vmem>>, %arg7: memref<8x48xf32, #tpu.memory_space<vmem>>) attributes {dimension_semantics = [#tpu.dimension_semantics<parallel>, #tpu.dimension_semantics<parallel>, #tpu.dimension_semantics<arbitrary>], iteration_bounds = array<i64: 2, 2, 1>, scalar_prefetch = 0 : i64, scratch_operands = 1 : i64, tpu.core_type = #tpu.core_type<tc>, window_params = [{transform_indices = @transform_0, window_bounds = array<i64: 1, 8, 32>}, {transform_indices = @transform_1, window_bounds = array<i64: 1, 32, 48>}, {transform_indices = @transform_2, window_bounds = array<i64: 1, 1, 48>}, {transform_indices = @transform_3, window_bounds = array<i64: 1, 1, 8, 48>}]} {
    %c0_i32 = arith.constant 0 : i32
    %0 = arith.cmpi eq, %arg2, %c0_i32 : i32
    %1 = arith.extui %0 : i1 to i32
    %c0_i32_0 = arith.constant 0 : i32
    %2 = arith.cmpi ne, %1, %c0_i32_0 : i32
    scf.if %2 {
      %cst_12 = arith.constant 0.000000e+00 : f32
      %14 = vector.broadcast %cst_12 : f32 to vector<8x48xf32>
      %c0_13 = arith.constant 0 : index
      %c0_14 = arith.constant 0 : index
      %15 = vector.load %arg7[%c0_13, %c0_14] : memref<8x48xf32, #tpu.memory_space<vmem>>, vector<8x48xf32>
      tpu.vector_store %arg7[%c0_13, %c0_14], %14 {strides = array<i32>} : memref<8x48xf32, #tpu.memory_space<vmem>>, vector<8x48xf32>,
    } else {
    }
    %c0 = arith.constant 0 : index
    %c0_1 = arith.constant 0 : index
    %3 = vector.load %arg7[%c0, %c0_1] : memref<8x48xf32, #tpu.memory_space<vmem>>, vector<8x48xf32>
    %c0_2 = arith.constant 0 : index
    %c0_3 = arith.constant 0 : index
    %c0_4 = arith.constant 0 : index
    %4 = vector.load %arg3[%c0_2, %c0_3, %c0_4] : memref<1x8x32xbf16, #tpu.memory_space<vmem>>, vector<1x8x32xbf16>
    %5 = vector.shape_cast %4 : vector<1x8x32xbf16> to vector<8x32xbf16>
    %c0_5 = arith.constant 0 : index
    %c0_6 = arith.constant 0 : index
    %c0_7 = arith.constant 0 : index
    %6 = vector.load %arg4[%c0_5, %c0_6, %c0_7] : memref<1x32x48xbf16, #tpu.memory_space<vmem>>, vector<1x32x48xbf16>
    %7 = vector.shape_cast %6 : vector<1x32x48xbf16> to vector<32x48xbf16>
    %cst = arith.constant dense<0.000000e+00> : vector<8x48xf32>
    %8 = tpu.matmul %5, %7, %cst {dimension_numbers = #tpu.dot_dimension_numbers<[1], [0], [0], [1], [0, 0, 1, 1], [], []>} : vector<8x32xbf16>, vector<32x48xbf16>, vector<8x48xf32> -> vector<8x48xf32>
    %9 = arith.addf %3, %8 : vector<8x48xf32>
    %c0_8 = arith.constant 0 : index
    %c0_9 = arith.constant 0 : index
    %10 = vector.load %arg7[%c0_8, %c0_9] : memref<8x48xf32, #tpu.memory_space<vmem>>, vector<8x48xf32>
    tpu.vector_store %arg7[%c0_8, %c0_9], %9 {strides = array<i32>} : memref<8x48xf32, #tpu.memory_space<vmem>>, vector<8x48xf32>,
    %c0_i32_10 = arith.constant 0 : i32
    %11 = arith.cmpi eq, %arg2, %c0_i32_10 : i32
    %12 = arith.extui %11 : i1 to i32
    %c0_i32_11 = arith.constant 0 : i32
    %13 = arith.cmpi ne, %12, %c0_i32_11 : i32
    scf.if %13 {
      %c0_12 = arith.constant 0 : index
      %c0_13 = arith.constant 0 : index
      %14 = vector.load %arg7[%c0_12, %c0_13] : memref<8x48xf32, #tpu.memory_space<vmem>>, vector<8x48xf32>
      %c0_14 = arith.constant 0 : index
      %c0_15 = arith.constant 0 : index
      %c0_16 = arith.constant 0 : index
      %15 = vector.load %arg5[%c0_14, %c0_15, %c0_16] : memref<1x1x48xf32, #tpu.memory_space<vmem>>, vector<1x1x48xf32>
      %16 = vector.shape_cast %15 : vector<1x1x48xf32> to vector<1x48xf32>
      %17 = vector.broadcast %16 : vector<1x48xf32> to vector<8x48xf32>
      %18 = arith.addf %14, %17 : vector<8x48xf32>
      %19 = arith.truncf %18 : vector<8x48xf32> to vector<8x48xbf16>
      %c0_17 = arith.constant 0 : index
      %c0_18 = arith.constant 0 : index
      %c0_19 = arith.constant 0 : index
      %c0_20 = arith.constant 0 : index
      %20 = vector.load %arg6[%c0_17, %c0_18, %c0_19, %c0_20] : memref<1x1x8x48xbf16, #tpu.memory_space<vmem>>, vector<1x1x8x48xbf16>
      %21 = vector.shape_cast %20 : vector<1x1x8x48xbf16> to vector<8x48xbf16>
      %22 = vector.shape_cast %19 : vector<8x48xbf16> to vector<1x1x8x48xbf16>
      tpu.vector_store %arg6[%c0_17, %c0_18, %c0_19, %c0_20], %22 {strides = array<i32>} : memref<1x1x8x48xbf16, #tpu.memory_space<vmem>>, vector<1x1x8x48xbf16>,
    } else {
    }
    return
  }
  func.func @transform_0(%arg0: i32, %arg1: i32, %arg2: i32) -> (i32, i32, i32) {
    %c0_i32 = arith.constant 0 : i32
    %c0_i32_0 = arith.constant 0 : i32
    return %arg0, %c0_i32, %arg2 : i32, i32, i32
  }
  func.func @transform_1(%arg0: i32, %arg1: i32, %arg2: i32) -> (i32, i32, i32) {
    %c0_i32 = arith.constant 0 : i32
    %c0_i32_0 = arith.constant 0 : i32
    return %arg1, %arg2, %c0_i32 : i32, i32, i32
  }
  func.func @transform_2(%arg0: i32, %arg1: i32, %arg2: i32) -> (i32, i32, i32) {
    %c0_i32 = arith.constant 0 : i32
    %c0_i32_0 = arith.constant 0 : i32
    %c0_i32_1 = arith.constant 0 : i32
    return %arg1, %c0_i32, %c0_i32_0 : i32, i32, i32
  }
  func.func @transform_3(%arg0: i32, %arg1: i32, %arg2: i32) -> (i32, i32, i32, i32) {
    %c0_i32 = arith.constant 0 : i32
    %c0_i32_0 = arith.constant 0 : i32
    %c0_i32_1 = arith.constant 0 : i32
    return %arg0, %arg1, %c0_i32, %c0_i32_0 : i32, i32, i32, i32
  }
}

module attributes {stable_mosaic.version = 11 : i64} {
  func.func @_attention_kernel(%arg0: i32, %arg1: i32, %arg2: memref<1x1x8x48xbf16, #tpu.memory_space<vmem>>, %arg3: memref<8x8xf32, #tpu.memory_space<vmem>>, %arg4: memref<1x1x8x16xbf16, #tpu.memory_space<vmem>>) attributes {dimension_semantics = [#tpu.dimension_semantics<parallel>, #tpu.dimension_semantics<parallel>], iteration_bounds = array<i64: 2, 2>, scalar_prefetch = 0 : i64, scratch_operands = 0 : i64, tpu.core_type = #tpu.core_type<tc>, window_params = [{transform_indices = @transform_0, window_bounds = array<i64: 1, 1, 8, 48>}, {pipeline_mode = #tpu.pipeline_mode<synchronous>, transform_indices = @transform_1, window_bounds = array<i64: 8, 8>}, {transform_indices = @transform_2, window_bounds = array<i64: 1, 1, 8, 16>}]} {
    %c0 = arith.constant 0 : index
    %c0_0 = arith.constant 0 : index
    %c0_1 = arith.constant 0 : index
    %c0_2 = arith.constant 0 : index
    %0 = vector.load %arg2[%c0, %c0_0, %c0_1, %c0_2] : memref<1x1x8x48xbf16, #tpu.memory_space<vmem>>, vector<1x1x8x48xbf16>
    %1 = vector.shape_cast %0 : vector<1x1x8x48xbf16> to vector<8x48xbf16>
    %2 = vector.extract_strided_slice %1 {offsets = [0, 0], sizes = [8, 16], strides = [1, 1]} : vector<8x48xbf16> to vector<8x16xbf16>
    %3 = vector.extract_strided_slice %1 {offsets = [0, 16], sizes = [8, 16], strides = [1, 1]} : vector<8x48xbf16> to vector<8x16xbf16>
    %4 = vector.extract_strided_slice %1 {offsets = [0, 32], sizes = [8, 16], strides = [1, 1]} : vector<8x48xbf16> to vector<8x16xbf16>
    %cst = arith.constant dense<0.000000e+00> : vector<8x8xf32>
    %5 = tpu.matmul %2, %3, %cst {dimension_numbers = #tpu.dot_dimension_numbers<[1], [1], [0], [0], [0, 0, 1, 0], [], []>} : vector<8x16xbf16>, vector<8x16xbf16>, vector<8x8xf32> -> vector<8x8xf32>
    %cst_3 = arith.constant 2.500000e-01 : f32
    %6 = vector.broadcast %cst_3 : f32 to vector<8x8xf32>
    %7 = arith.mulf %5, %6 : vector<8x8xf32>
    %c0_4 = arith.constant 0 : index
    %c0_5 = arith.constant 0 : index
    %8 = vector.load %arg3[%c0_4, %c0_5] : memref<8x8xf32, #tpu.memory_space<vmem>>, vector<8x8xf32>
    %9 = arith.addf %7, %8 : vector<8x8xf32>
    %cst_6 = arith.constant dense<0xFF800000> : vector<8xf32>
    %10 = vector.multi_reduction <maximumf>, %9, %cst_6 [1] : vector<8x8xf32> to vector<8xf32>
    %11 = vector.shape_cast %10 : vector<8xf32> to vector<8x1xf32>
    %12 = vector.broadcast %11 : vector<8x1xf32> to vector<8x8xf32>
    %13 = arith.subf %9, %12 : vector<8x8xf32>
    %14 = math.exp %13 : vector<8x8xf32>
    %cst_7 = arith.constant dense<0.000000e+00> : vector<8xf32>
    %15 = vector.multi_reduction <add>, %14, %cst_7 [1] : vector<8x8xf32> to vector<8xf32>
    %16 = vector.shape_cast %15 : vector<8xf32> to vector<8x1xf32>
    %17 = tpu.reciprocal %16 {approx = true} : vector<8x1xf32> -> vector<8x1xf32>
    %18 = vector.broadcast %17 : vector<8x1xf32> to vector<8x8xf32>
    %19 = arith.mulf %14, %18 : vector<8x8xf32>
    %20 = arith.truncf %19 : vector<8x8xf32> to vector<8x8xbf16>
    %cst_8 = arith.constant dense<0.000000e+00> : vector<8x16xf32>
    %21 = tpu.matmul %20, %4, %cst_8 {dimension_numbers = #tpu.dot_dimension_numbers<[1], [0], [0], [1], [0, 0, 1, 1], [], []>} : vector<8x8xbf16>, vector<8x16xbf16>, vector<8x16xf32> -> vector<8x16xf32>
    %22 = arith.truncf %21 : vector<8x16xf32> to vector<8x16xbf16>
    %c0_9 = arith.constant 0 : index
    %c0_10 = arith.constant 0 : index
    %c0_11 = arith.constant 0 : index
    %c0_12 = arith.constant 0 : index
    %23 = vector.load %arg4[%c0_9, %c0_10, %c0_11, %c0_12] : memref<1x1x8x16xbf16, #tpu.memory_space<vmem>>, vector<1x1x8x16xbf16>
    %24 = vector.shape_cast %23 : vector<1x1x8x16xbf16> to vector<8x16xbf16>
    %25 = vector.shape_cast %22 : vector<8x16xbf16> to vector<1x1x8x16xbf16>
    tpu.vector_store %arg4[%c0_9, %c0_10, %c0_11, %c0_12], %25 {strides = array<i32>} : memref<1x1x8x16xbf16, #tpu.memory_space<vmem>>, vector<1x1x8x16xbf16>,
    return
  }
  func.func @transform_0(%arg0: i32, %arg1: i32) -> (i32, i32, i32, i32) {
    %c0_i32 = arith.constant 0 : i32
    %c0_i32_0 = arith.constant 0 : i32
    %c0_i32_1 = arith.constant 0 : i32
    return %arg0, %arg1, %c0_i32, %c0_i32_0 : i32, i32, i32, i32
  }
  func.func @transform_1(%arg0: i32, %arg1: i32) -> (i32, i32) {
    %c0_i32 = arith.constant 0 : i32
    %c0_i32_0 = arith.constant 0 : i32
    %c0_i32_1 = arith.constant 0 : i32
    return %c0_i32, %c0_i32_0 : i32, i32
  }
  func.func @transform_2(%arg0: i32, %arg1: i32) -> (i32, i32, i32, i32) {
    %c0_i32 = arith.constant 0 : i32
    %c0_i32_0 = arith.constant 0 : i32
    %c0_i32_1 = arith.constant 0 : i32
    return %arg0, %arg1, %c0_i32, %c0_i32_0 : i32, i32, i32, i32
  }
}

module attributes {stable_mosaic.version = 11 : i64} {
  func.func @_proj_add_ln_kernel(%arg0: i32, %arg1: i32, %arg2: i32, %arg3: memref<1x1x8x16xbf16, #tpu.memory_space<vmem>>, %arg4: memref<1x16x32xbf16, #tpu.memory_space<vmem>>, %arg5: memref<1x32xf32, #tpu.memory_space<vmem>>, %arg6: memref<1x8x32xbf16, #tpu.memory_space<vmem>>, %arg7: memref<1x32xf32, #tpu.memory_space<vmem>>, %arg8: memref<1x32xf32, #tpu.memory_space<vmem>>, %arg9: memref<1x8x32xbf16, #tpu.memory_space<vmem>>, %arg10: memref<8x32xf32, #tpu.memory_space<vmem>>) attributes {dimension_semantics = [#tpu.dimension_semantics<parallel>, #tpu.dimension_semantics<parallel>, #tpu.dimension_semantics<arbitrary>], iteration_bounds = array<i64: 2, 1, 2>, scalar_prefetch = 0 : i64, scratch_operands = 1 : i64, tpu.core_type = #tpu.core_type<tc>, window_params = [{transform_indices = @transform_0, window_bounds = array<i64: 1, 1, 8, 16>}, {transform_indices = @transform_1, window_bounds = array<i64: 1, 16, 32>}, {pipeline_mode = #tpu.pipeline_mode<synchronous>, transform_indices = @transform_2, window_bounds = array<i64: 1, 32>}, {transform_indices = @transform_3, window_bounds = array<i64: 1, 8, 32>}, {pipeline_mode = #tpu.pipeline_mode<synchronous>, transform_indices = @transform_4, window_bounds = array<i64: 1, 32>}, {pipeline_mode = #tpu.pipeline_mode<synchronous>, transform_indices = @transform_5, window_bounds = array<i64: 1, 32>}, {transform_indices = @transform_6, window_bounds = array<i64: 1, 8, 32>}]} {
    %c0_i32 = arith.constant 0 : i32
    %0 = arith.cmpi eq, %arg2, %c0_i32 : i32
    %1 = arith.extui %0 : i1 to i32
    %c0_i32_0 = arith.constant 0 : i32
    %2 = arith.cmpi ne, %1, %c0_i32_0 : i32
    scf.if %2 {
      %cst_12 = arith.constant 0.000000e+00 : f32
      %14 = vector.broadcast %cst_12 : f32 to vector<8x32xf32>
      %c0_13 = arith.constant 0 : index
      %c0_14 = arith.constant 0 : index
      %15 = vector.load %arg10[%c0_13, %c0_14] : memref<8x32xf32, #tpu.memory_space<vmem>>, vector<8x32xf32>
      tpu.vector_store %arg10[%c0_13, %c0_14], %14 {strides = array<i32>} : memref<8x32xf32, #tpu.memory_space<vmem>>, vector<8x32xf32>,
    } else {
    }
    %c0 = arith.constant 0 : index
    %c0_1 = arith.constant 0 : index
    %3 = vector.load %arg10[%c0, %c0_1] : memref<8x32xf32, #tpu.memory_space<vmem>>, vector<8x32xf32>
    %c0_2 = arith.constant 0 : index
    %c0_3 = arith.constant 0 : index
    %c0_4 = arith.constant 0 : index
    %c0_5 = arith.constant 0 : index
    %4 = vector.load %arg3[%c0_2, %c0_3, %c0_4, %c0_5] : memref<1x1x8x16xbf16, #tpu.memory_space<vmem>>, vector<1x1x8x16xbf16>
    %5 = vector.shape_cast %4 : vector<1x1x8x16xbf16> to vector<8x16xbf16>
    %c0_6 = arith.constant 0 : index
    %c0_7 = arith.constant 0 : index
    %c0_8 = arith.constant 0 : index
    %6 = vector.load %arg4[%c0_6, %c0_7, %c0_8] : memref<1x16x32xbf16, #tpu.memory_space<vmem>>, vector<1x16x32xbf16>
    %7 = vector.shape_cast %6 : vector<1x16x32xbf16> to vector<16x32xbf16>
    %cst = arith.constant dense<0.000000e+00> : vector<8x32xf32>
    %8 = tpu.matmul %5, %7, %cst {dimension_numbers = #tpu.dot_dimension_numbers<[1], [0], [0], [1], [0, 0, 1, 1], [], []>} : vector<8x16xbf16>, vector<16x32xbf16>, vector<8x32xf32> -> vector<8x32xf32>
    %9 = arith.addf %3, %8 : vector<8x32xf32>
    %c0_9 = arith.constant 0 : index
    %c0_10 = arith.constant 0 : index
    %10 = vector.load %arg10[%c0_9, %c0_10] : memref<8x32xf32, #tpu.memory_space<vmem>>, vector<8x32xf32>
    tpu.vector_store %arg10[%c0_9, %c0_10], %9 {strides = array<i32>} : memref<8x32xf32, #tpu.memory_space<vmem>>, vector<8x32xf32>,
    %c1_i32 = arith.constant 1 : i32
    %11 = arith.cmpi eq, %arg2, %c1_i32 : i32
    %12 = arith.extui %11 : i1 to i32
    %c0_i32_11 = arith.constant 0 : i32
    %13 = arith.cmpi ne, %12, %c0_i32_11 : i32
    scf.if %13 {
      %c0_12 = arith.constant 0 : index
      %c0_13 = arith.constant 0 : index
      %14 = vector.load %arg10[%c0_12, %c0_13] : memref<8x32xf32, #tpu.memory_space<vmem>>, vector<8x32xf32>
      %c0_14 = arith.constant 0 : index
      %c0_15 = arith.constant 0 : index
      %15 = vector.load %arg5[%c0_14, %c0_15] : memref<1x32xf32, #tpu.memory_space<vmem>>, vector<1x32xf32>
      %16 = vector.broadcast %15 : vector<1x32xf32> to vector<8x32xf32>
      %17 = arith.addf %14, %16 : vector<8x32xf32>
      %c0_16 = arith.constant 0 : index
      %c0_17 = arith.constant 0 : index
      %c0_18 = arith.constant 0 : index
      %18 = vector.load %arg6[%c0_16, %c0_17, %c0_18] : memref<1x8x32xbf16, #tpu.memory_space<vmem>>, vector<1x8x32xbf16>
      %19 = vector.shape_cast %18 : vector<1x8x32xbf16> to vector<8x32xbf16>
      %20 = arith.extf %19 : vector<8x32xbf16> to vector<8x32xf32>
      %21 = arith.addf %17, %20 : vector<8x32xf32>
      %cst_19 = arith.constant dense<0.000000e+00> : vector<8xf32>
      %22 = vector.multi_reduction <add>, %21, %cst_19 [1] : vector<8x32xf32> to vector<8xf32>
      %23 = vector.shape_cast %22 : vector<8xf32> to vector<8x1xf32>
      %cst_20 = arith.constant 3.200000e+01 : f32
      %24 = vector.broadcast %cst_20 : f32 to vector<8x1xf32>
      %25 = arith.divf %23, %24 : vector<8x1xf32>
      %26 = vector.broadcast %25 : vector<8x1xf32> to vector<8x32xf32>
      %27 = arith.subf %21, %26 : vector<8x32xf32>
      %28 = arith.mulf %27, %27 : vector<8x32xf32>
      %cst_21 = arith.constant dense<0.000000e+00> : vector<8xf32>
      %29 = vector.multi_reduction <add>, %28, %cst_21 [1] : vector<8x32xf32> to vector<8xf32>
      %30 = vector.shape_cast %29 : vector<8xf32> to vector<8x1xf32>
      %cst_22 = arith.constant 3.200000e+01 : f32
      %31 = vector.broadcast %cst_22 : f32 to vector<8x1xf32>
      %32 = arith.divf %30, %31 : vector<8x1xf32>
      %cst_23 = arith.constant 9.99999974E-6 : f32
      %33 = vector.broadcast %cst_23 : f32 to vector<8x1xf32>
      %34 = arith.addf %32, %33 : vector<8x1xf32>
      %35 = math.rsqrt %34 : vector<8x1xf32>
      %36 = vector.broadcast %35 : vector<8x1xf32> to vector<8x32xf32>
      %37 = arith.mulf %27, %36 : vector<8x32xf32>
      %c0_24 = arith.constant 0 : index
      %c0_25 = arith.constant 0 : index
      %38 = vector.load %arg7[%c0_24, %c0_25] : memref<1x32xf32, #tpu.memory_space<vmem>>, vector<1x32xf32>
      %39 = vector.broadcast %38 : vector<1x32xf32> to vector<8x32xf32>
      %40 = arith.mulf %37, %39 : vector<8x32xf32>
      %c0_26 = arith.constant 0 : index
      %c0_27 = arith.constant 0 : index
      %41 = vector.load %arg8[%c0_26, %c0_27] : memref<1x32xf32, #tpu.memory_space<vmem>>, vector<1x32xf32>
      %42 = vector.broadcast %41 : vector<1x32xf32> to vector<8x32xf32>
      %43 = arith.addf %40, %42 : vector<8x32xf32>
      %44 = arith.truncf %43 : vector<8x32xf32> to vector<8x32xbf16>
      %c0_28 = arith.constant 0 : index
      %c0_29 = arith.constant 0 : index
      %c0_30 = arith.constant 0 : index
      %45 = vector.load %arg9[%c0_28, %c0_29, %c0_30] : memref<1x8x32xbf16, #tpu.memory_space<vmem>>, vector<1x8x32xbf16>
      %46 = vector.shape_cast %45 : vector<1x8x32xbf16> to vector<8x32xbf16>
      %47 = vector.shape_cast %44 : vector<8x32xbf16> to vector<1x8x32xbf16>
      tpu.vector_store %arg9[%c0_28, %c0_29, %c0_30], %47 {strides = array<i32>} : memref<1x8x32xbf16, #tpu.memory_space<vmem>>, vector<1x8x32xbf16>,
    } else {
    }
    return
  }
  func.func @transform_0(%arg0: i32, %arg1: i32, %arg2: i32) -> (i32, i32, i32, i32) {
    %c0_i32 = arith.constant 0 : i32
    %c0_i32_0 = arith.constant 0 : i32
    return %arg0, %arg2, %arg1, %c0_i32 : i32, i32, i32, i32
  }
  func.func @transform_1(%arg0: i32, %arg1: i32, %arg2: i32) -> (i32, i32, i32) {
    %c0_i32 = arith.constant 0 : i32
    %c0_i32_0 = arith.constant 0 : i32
    %c0_i32_1 = arith.constant 0 : i32
    return %arg2, %c0_i32, %c0_i32_0 : i32, i32, i32
  }
  func.func @transform_2(%arg0: i32, %arg1: i32, %arg2: i32) -> (i32, i32) {
    %c0_i32 = arith.constant 0 : i32
    %c0_i32_0 = arith.constant 0 : i32
    %c0_i32_1 = arith.constant 0 : i32
    return %c0_i32, %c0_i32_0 : i32, i32
  }
  func.func @transform_3(%arg0: i32, %arg1: i32, %arg2: i32) -> (i32, i32, i32) {
    %c0_i32 = arith.constant 0 : i32
    %c0_i32_0 = arith.constant 0 : i32
    return %arg0, %arg1, %c0_i32 : i32, i32, i32
  }
  func.func @transform_4(%arg0: i32, %arg1: i32, %arg2: i32) -> (i32, i32) {
    %c0_i32 = arith.constant 0 : i32
    %c0_i32_0 = arith.constant 0 : i32
    %c0_i32_1 = arith.constant 0 : i32
    return %c0_i32, %c0_i32_0 : i32, i32
  }
  func.func @transform_5(%arg0: i32, %arg1: i32, %arg2: i32) -> (i32, i32) {
    %c0_i32 = arith.constant 0 : i32
    %c0_i32_0 = arith.constant 0 : i32
    %c0_i32_1 = arith.constant 0 : i32
    return %c0_i32, %c0_i32_0 : i32, i32
  }
  func.func @transform_6(%arg0: i32, %arg1: i32, %arg2: i32) -> (i32, i32, i32) {
    %c0_i32 = arith.constant 0 : i32
    %c0_i32_0 = arith.constant 0 : i32
    return %arg0, %arg1, %c0_i32 : i32, i32, i32
  }
}

module attributes {stable_mosaic.version = 11 : i64} {
  func.func @_ffn_ln_kernel(%arg0: i32, %arg1: i32, %arg2: i32, %arg3: memref<1x8x32xbf16, #tpu.memory_space<vmem>>, %arg4: memref<32x64xbf16, #tpu.memory_space<vmem>>, %arg5: memref<1x64xf32, #tpu.memory_space<vmem>>, %arg6: memref<64x32xbf16, #tpu.memory_space<vmem>>, %arg7: memref<1x32xf32, #tpu.memory_space<vmem>>, %arg8: memref<1x32xf32, #tpu.memory_space<vmem>>, %arg9: memref<1x32xf32, #tpu.memory_space<vmem>>, %arg10: memref<1x8x32xbf16, #tpu.memory_space<vmem>>, %arg11: memref<8x32xf32, #tpu.memory_space<vmem>>) attributes {dimension_semantics = [#tpu.dimension_semantics<parallel>, #tpu.dimension_semantics<parallel>, #tpu.dimension_semantics<arbitrary>], iteration_bounds = array<i64: 2, 1, 1>, scalar_prefetch = 0 : i64, scratch_operands = 1 : i64, tpu.core_type = #tpu.core_type<tc>, window_params = [{transform_indices = @transform_0, window_bounds = array<i64: 1, 8, 32>}, {transform_indices = @transform_1, window_bounds = array<i64: 32, 64>}, {transform_indices = @transform_2, window_bounds = array<i64: 1, 64>}, {transform_indices = @transform_3, window_bounds = array<i64: 64, 32>}, {pipeline_mode = #tpu.pipeline_mode<synchronous>, transform_indices = @transform_4, window_bounds = array<i64: 1, 32>}, {pipeline_mode = #tpu.pipeline_mode<synchronous>, transform_indices = @transform_5, window_bounds = array<i64: 1, 32>}, {pipeline_mode = #tpu.pipeline_mode<synchronous>, transform_indices = @transform_6, window_bounds = array<i64: 1, 32>}, {transform_indices = @transform_7, window_bounds = array<i64: 1, 8, 32>}]} {
    %c0 = arith.constant 0 : index
    %c0_0 = arith.constant 0 : index
    %c0_1 = arith.constant 0 : index
    %0 = vector.load %arg3[%c0, %c0_0, %c0_1] : memref<1x8x32xbf16, #tpu.memory_space<vmem>>, vector<1x8x32xbf16>
    %1 = vector.shape_cast %0 : vector<1x8x32xbf16> to vector<8x32xbf16>
    %c0_i32 = arith.constant 0 : i32
    %2 = arith.cmpi eq, %arg2, %c0_i32 : i32
    %3 = arith.extui %2 : i1 to i32
    %c0_i32_2 = arith.constant 0 : i32
    %4 = arith.cmpi ne, %3, %c0_i32_2 : i32
    scf.if %4 {
      %cst_17 = arith.constant 0.000000e+00 : f32
      %21 = vector.broadcast %cst_17 : f32 to vector<8x32xf32>
      %c0_18 = arith.constant 0 : index
      %c0_19 = arith.constant 0 : index
      %22 = vector.load %arg11[%c0_18, %c0_19] : memref<8x32xf32, #tpu.memory_space<vmem>>, vector<8x32xf32>
      tpu.vector_store %arg11[%c0_18, %c0_19], %21 {strides = array<i32>} : memref<8x32xf32, #tpu.memory_space<vmem>>, vector<8x32xf32>,
    } else {
    }
    %c0_3 = arith.constant 0 : index
    %c0_4 = arith.constant 0 : index
    %5 = vector.load %arg4[%c0_3, %c0_4] : memref<32x64xbf16, #tpu.memory_space<vmem>>, vector<32x64xbf16>
    %cst = arith.constant dense<0.000000e+00> : vector<8x64xf32>
    %6 = tpu.matmul %1, %5, %cst {dimension_numbers = #tpu.dot_dimension_numbers<[1], [0], [0], [1], [0, 0, 1, 1], [], []>} : vector<8x32xbf16>, vector<32x64xbf16>, vector<8x64xf32> -> vector<8x64xf32>
    %c0_5 = arith.constant 0 : index
    %c0_6 = arith.constant 0 : index
    %7 = vector.load %arg5[%c0_5, %c0_6] : memref<1x64xf32, #tpu.memory_space<vmem>>, vector<1x64xf32>
    %8 = vector.broadcast %7 : vector<1x64xf32> to vector<8x64xf32>
    %9 = arith.addf %6, %8 : vector<8x64xf32>
    %cst_7 = arith.constant 0.000000e+00 : f32
    %10 = vector.broadcast %cst_7 : f32 to vector<8x64xf32>
    %11 = arith.maximumf %9, %10 : vector<8x64xf32>
    %c0_8 = arith.constant 0 : index
    %c0_9 = arith.constant 0 : index
    %12 = vector.load %arg11[%c0_8, %c0_9] : memref<8x32xf32, #tpu.memory_space<vmem>>, vector<8x32xf32>
    %13 = arith.truncf %11 : vector<8x64xf32> to vector<8x64xbf16>
    %c0_10 = arith.constant 0 : index
    %c0_11 = arith.constant 0 : index
    %14 = vector.load %arg6[%c0_10, %c0_11] : memref<64x32xbf16, #tpu.memory_space<vmem>>, vector<64x32xbf16>
    %cst_12 = arith.constant dense<0.000000e+00> : vector<8x32xf32>
    %15 = tpu.matmul %13, %14, %cst_12 {dimension_numbers = #tpu.dot_dimension_numbers<[1], [0], [0], [1], [0, 0, 1, 1], [], []>} : vector<8x64xbf16>, vector<64x32xbf16>, vector<8x32xf32> -> vector<8x32xf32>
    %16 = arith.addf %12, %15 : vector<8x32xf32>
    %c0_13 = arith.constant 0 : index
    %c0_14 = arith.constant 0 : index
    %17 = vector.load %arg11[%c0_13, %c0_14] : memref<8x32xf32, #tpu.memory_space<vmem>>, vector<8x32xf32>
    tpu.vector_store %arg11[%c0_13, %c0_14], %16 {strides = array<i32>} : memref<8x32xf32, #tpu.memory_space<vmem>>, vector<8x32xf32>,
    %c0_i32_15 = arith.constant 0 : i32
    %18 = arith.cmpi eq, %arg2, %c0_i32_15 : i32
    %19 = arith.extui %18 : i1 to i32
    %c0_i32_16 = arith.constant 0 : i32
    %20 = arith.cmpi ne, %19, %c0_i32_16 : i32
    scf.if %20 {
      %c0_17 = arith.constant 0 : index
      %c0_18 = arith.constant 0 : index
      %21 = vector.load %arg11[%c0_17, %c0_18] : memref<8x32xf32, #tpu.memory_space<vmem>>, vector<8x32xf32>
      %c0_19 = arith.constant 0 : index
      %c0_20 = arith.constant 0 : index
      %22 = vector.load %arg7[%c0_19, %c0_20] : memref<1x32xf32, #tpu.memory_space<vmem>>, vector<1x32xf32>
      %23 = vector.broadcast %22 : vector<1x32xf32> to vector<8x32xf32>
      %24 = arith.addf %21, %23 : vector<8x32xf32>
      %25 = arith.extf %1 : vector<8x32xbf16> to vector<8x32xf32>
      %26 = arith.addf %24, %25 : vector<8x32xf32>
      %cst_21 = arith.constant dense<0.000000e+00> : vector<8xf32>
      %27 = vector.multi_reduction <add>, %26, %cst_21 [1] : vector<8x32xf32> to vector<8xf32>
      %28 = vector.shape_cast %27 : vector<8xf32> to vector<8x1xf32>
      %cst_22 = arith.constant 3.200000e+01 : f32
      %29 = vector.broadcast %cst_22 : f32 to vector<8x1xf32>
      %30 = arith.divf %28, %29 : vector<8x1xf32>
      %31 = vector.broadcast %30 : vector<8x1xf32> to vector<8x32xf32>
      %32 = arith.subf %26, %31 : vector<8x32xf32>
      %33 = arith.mulf %32, %32 : vector<8x32xf32>
      %cst_23 = arith.constant dense<0.000000e+00> : vector<8xf32>
      %34 = vector.multi_reduction <add>, %33, %cst_23 [1] : vector<8x32xf32> to vector<8xf32>
      %35 = vector.shape_cast %34 : vector<8xf32> to vector<8x1xf32>
      %cst_24 = arith.constant 3.200000e+01 : f32
      %36 = vector.broadcast %cst_24 : f32 to vector<8x1xf32>
      %37 = arith.divf %35, %36 : vector<8x1xf32>
      %cst_25 = arith.constant 9.99999974E-6 : f32
      %38 = vector.broadcast %cst_25 : f32 to vector<8x1xf32>
      %39 = arith.addf %37, %38 : vector<8x1xf32>
      %40 = math.rsqrt %39 : vector<8x1xf32>
      %41 = vector.broadcast %40 : vector<8x1xf32> to vector<8x32xf32>
      %42 = arith.mulf %32, %41 : vector<8x32xf32>
      %c0_26 = arith.constant 0 : index
      %c0_27 = arith.constant 0 : index
      %43 = vector.load %arg8[%c0_26, %c0_27] : memref<1x32xf32, #tpu.memory_space<vmem>>, vector<1x32xf32>
      %44 = vector.broadcast %43 : vector<1x32xf32> to vector<8x32xf32>
      %45 = arith.mulf %42, %44 : vector<8x32xf32>
      %c0_28 = arith.constant 0 : index
      %c0_29 = arith.constant 0 : index
      %46 = vector.load %arg9[%c0_28, %c0_29] : memref<1x32xf32, #tpu.memory_space<vmem>>, vector<1x32xf32>
      %47 = vector.broadcast %46 : vector<1x32xf32> to vector<8x32xf32>
      %48 = arith.addf %45, %47 : vector<8x32xf32>
      %49 = arith.truncf %48 : vector<8x32xf32> to vector<8x32xbf16>
      %c0_30 = arith.constant 0 : index
      %c0_31 = arith.constant 0 : index
      %c0_32 = arith.constant 0 : index
      %50 = vector.load %arg10[%c0_30, %c0_31, %c0_32] : memref<1x8x32xbf16, #tpu.memory_space<vmem>>, vector<1x8x32xbf16>
      %51 = vector.shape_cast %50 : vector<1x8x32xbf16> to vector<8x32xbf16>
      %52 = vector.shape_cast %49 : vector<8x32xbf16> to vector<1x8x32xbf16>
      tpu.vector_store %arg10[%c0_30, %c0_31, %c0_32], %52 {strides = array<i32>} : memref<1x8x32xbf16, #tpu.memory_space<vmem>>, vector<1x8x32xbf16>,
    } else {
    }
    return
  }
  func.func @transform_0(%arg0: i32, %arg1: i32, %arg2: i32) -> (i32, i32, i32) {
    %c0_i32 = arith.constant 0 : i32
    %c0_i32_0 = arith.constant 0 : i32
    return %arg0, %arg1, %c0_i32 : i32, i32, i32
  }
  func.func @transform_1(%arg0: i32, %arg1: i32, %arg2: i32) -> (i32, i32) {
    %c0_i32 = arith.constant 0 : i32
    %c0_i32_0 = arith.constant 0 : i32
    return %c0_i32, %arg2 : i32, i32
  }
  func.func @transform_2(%arg0: i32, %arg1: i32, %arg2: i32) -> (i32, i32) {
    %c0_i32 = arith.constant 0 : i32
    %c0_i32_0 = arith.constant 0 : i32
    return %c0_i32, %arg2 : i32, i32
  }
  func.func @transform_3(%arg0: i32, %arg1: i32, %arg2: i32) -> (i32, i32) {
    %c0_i32 = arith.constant 0 : i32
    %c0_i32_0 = arith.constant 0 : i32
    return %arg2, %c0_i32 : i32, i32
  }
  func.func @transform_4(%arg0: i32, %arg1: i32, %arg2: i32) -> (i32, i32) {
    %c0_i32 = arith.constant 0 : i32
    %c0_i32_0 = arith.constant 0 : i32
    %c0_i32_1 = arith.constant 0 : i32
    return %c0_i32, %c0_i32_0 : i32, i32
  }
  func.func @transform_5(%arg0: i32, %arg1: i32, %arg2: i32) -> (i32, i32) {
    %c0_i32 = arith.constant 0 : i32
    %c0_i32_0 = arith.constant 0 : i32
    %c0_i32_1 = arith.constant 0 : i32
    return %c0_i32, %c0_i32_0 : i32, i32
  }
  func.func @transform_6(%arg0: i32, %arg1: i32, %arg2: i32) -> (i32, i32) {
    %c0_i32 = arith.constant 0 : i32
    %c0_i32_0 = arith.constant 0 : i32
    %c0_i32_1 = arith.constant 0 : i32
    return %c0_i32, %c0_i32_0 : i32, i32
  }
  func.func @transform_7(%arg0: i32, %arg1: i32, %arg2: i32) -> (i32, i32, i32) {
    %c0_i32 = arith.constant 0 : i32
    %c0_i32_0 = arith.constant 0 : i32
    return %arg0, %arg1, %c0_i32 : i32, i32, i32
  }
}

module attributes {stable_mosaic.version = 11 : i64} {
  func.func @_matmul_bias_kernel(%arg0: i32, %arg1: i32, %arg2: i32, %arg3: memref<16x32xbf16, #tpu.memory_space<vmem>>, %arg4: memref<32x128xbf16, #tpu.memory_space<vmem>>, %arg5: memref<1x128xf32, #tpu.memory_space<vmem>>, %arg6: memref<16x128xf32, #tpu.memory_space<vmem>>, %arg7: memref<16x128xf32, #tpu.memory_space<vmem>>) attributes {dimension_semantics = [#tpu.dimension_semantics<parallel>, #tpu.dimension_semantics<parallel>, #tpu.dimension_semantics<arbitrary>], iteration_bounds = array<i64: 1, 1, 1>, scalar_prefetch = 0 : i64, scratch_operands = 1 : i64, tpu.core_type = #tpu.core_type<tc>, window_params = [{transform_indices = @transform_0, window_bounds = array<i64: 16, 32>}, {transform_indices = @transform_1, window_bounds = array<i64: 32, 128>}, {transform_indices = @transform_2, window_bounds = array<i64: 1, 128>}, {transform_indices = @transform_3, window_bounds = array<i64: 16, 128>}]} {
    %c0_i32 = arith.constant 0 : i32
    %0 = arith.cmpi eq, %arg2, %c0_i32 : i32
    %1 = arith.extui %0 : i1 to i32
    %c0_i32_0 = arith.constant 0 : i32
    %2 = arith.cmpi ne, %1, %c0_i32_0 : i32
    scf.if %2 {
      %cst_10 = arith.constant 0.000000e+00 : f32
      %12 = vector.broadcast %cst_10 : f32 to vector<16x128xf32>
      %c0_11 = arith.constant 0 : index
      %c0_12 = arith.constant 0 : index
      %13 = vector.load %arg7[%c0_11, %c0_12] : memref<16x128xf32, #tpu.memory_space<vmem>>, vector<16x128xf32>
      tpu.vector_store %arg7[%c0_11, %c0_12], %12 {strides = array<i32>} : memref<16x128xf32, #tpu.memory_space<vmem>>, vector<16x128xf32>,
    } else {
    }
    %c0 = arith.constant 0 : index
    %c0_1 = arith.constant 0 : index
    %3 = vector.load %arg7[%c0, %c0_1] : memref<16x128xf32, #tpu.memory_space<vmem>>, vector<16x128xf32>
    %c0_2 = arith.constant 0 : index
    %c0_3 = arith.constant 0 : index
    %4 = vector.load %arg3[%c0_2, %c0_3] : memref<16x32xbf16, #tpu.memory_space<vmem>>, vector<16x32xbf16>
    %c0_4 = arith.constant 0 : index
    %c0_5 = arith.constant 0 : index
    %5 = vector.load %arg4[%c0_4, %c0_5] : memref<32x128xbf16, #tpu.memory_space<vmem>>, vector<32x128xbf16>
    %cst = arith.constant dense<0.000000e+00> : vector<16x128xf32>
    %6 = tpu.matmul %4, %5, %cst {dimension_numbers = #tpu.dot_dimension_numbers<[1], [0], [0], [1], [0, 0, 1, 1], [], []>} : vector<16x32xbf16>, vector<32x128xbf16>, vector<16x128xf32> -> vector<16x128xf32>
    %7 = arith.addf %3, %6 : vector<16x128xf32>
    %c0_6 = arith.constant 0 : index
    %c0_7 = arith.constant 0 : index
    %8 = vector.load %arg7[%c0_6, %c0_7] : memref<16x128xf32, #tpu.memory_space<vmem>>, vector<16x128xf32>
    tpu.vector_store %arg7[%c0_6, %c0_7], %7 {strides = array<i32>} : memref<16x128xf32, #tpu.memory_space<vmem>>, vector<16x128xf32>,
    %c0_i32_8 = arith.constant 0 : i32
    %9 = arith.cmpi eq, %arg2, %c0_i32_8 : i32
    %10 = arith.extui %9 : i1 to i32
    %c0_i32_9 = arith.constant 0 : i32
    %11 = arith.cmpi ne, %10, %c0_i32_9 : i32
    scf.if %11 {
      %c0_10 = arith.constant 0 : index
      %c0_11 = arith.constant 0 : index
      %12 = vector.load %arg7[%c0_10, %c0_11] : memref<16x128xf32, #tpu.memory_space<vmem>>, vector<16x128xf32>
      %c0_12 = arith.constant 0 : index
      %c0_13 = arith.constant 0 : index
      %13 = vector.load %arg5[%c0_12, %c0_13] : memref<1x128xf32, #tpu.memory_space<vmem>>, vector<1x128xf32>
      %14 = vector.broadcast %13 : vector<1x128xf32> to vector<16x128xf32>
      %15 = arith.addf %12, %14 : vector<16x128xf32>
      %c0_14 = arith.constant 0 : index
      %c0_15 = arith.constant 0 : index
      %16 = vector.load %arg6[%c0_14, %c0_15] : memref<16x128xf32, #tpu.memory_space<vmem>>, vector<16x128xf32>
      tpu.vector_store %arg6[%c0_14, %c0_15], %15 {strides = array<i32>} : memref<16x128xf32, #tpu.memory_space<vmem>>, vector<16x128xf32>,
    } else {
    }
    return
  }
  func.func @transform_0(%arg0: i32, %arg1: i32, %arg2: i32) -> (i32, i32) {
    %c0_i32 = arith.constant 0 : i32
    return %arg0, %arg2 : i32, i32
  }
  func.func @transform_1(%arg0: i32, %arg1: i32, %arg2: i32) -> (i32, i32) {
    %c0_i32 = arith.constant 0 : i32
    return %arg2, %arg1 : i32, i32
  }
  func.func @transform_2(%arg0: i32, %arg1: i32, %arg2: i32) -> (i32, i32) {
    %c0_i32 = arith.constant 0 : i32
    %c0_i32_0 = arith.constant 0 : i32
    return %c0_i32, %arg1 : i32, i32
  }
  func.func @transform_3(%arg0: i32, %arg1: i32, %arg2: i32) -> (i32, i32) {
    %c0_i32 = arith.constant 0 : i32
    return %arg0, %arg1 : i32, i32
  }
}

</mosaic_0001>

<llo_original>
// kernel: transformer_forward.10
$region0: #{transformer_forward.10}
  #allocation0 [shape = 'u32[]', space=smem, size = 0x4, offset = 0x4, fixed_abs, tag = 'smem constant byte address 0x4 - core index']
  #allocation1 [shape = 'u32[144,128]{1,0:T(1,128)}', space=vmem, size = 0x12000, scoped, tag = 'internal scratch']
  %s0 = inlined_call_operand.vmem [shape: bf16[2,2,8,48], index: 0, kind: input, shape index: {}]
  %s1 = inlined_call_operand.vmem [shape: f32[8,8], index: 1, kind: input, shape index: {}]
  %s2 = inlined_call_operand.vmem [shape: bf16[2,2,8,16], index: 2, kind: output, shape index: {}]
  %s3 = sld [smem:[#allocation0]]
  $region41: #{transformer_forward.10} parent=0
    _
  %s5 = ssub.s32 1, %s3
  %s6 = scalar_select 0, %s5, %s3
  loop: start=0, step=1, limit=6
  $region2: #{transformer_forward.10} parent=0 // loop_pre_header
    _
  $region3: #{transformer_forward.10} parent=0 // loop_header
    %s8 = sphi 0, %s12
    %p9 = scmp.ge.s32.totalorder %s8, 6
    %s15 = sphi 0, %s27
    %s16 = sphi 0, %s23
    %s17 = sphi 0, %s15
    %s18 = sphi 0, %s16
    %s19 = sphi 0, %s17
    %s20 = sphi 0, %s18
    %s32 = sphi 0, %s34
    %s35 = sphi 0, %s32
    %s36 = sphi 0, %s35
    %s52 = sphi 0, %s36
    %s56 = sphi 0, %s56
    %s58 = sphi 0, %s56
    %s59 = sphi 0, %s58
    %s73 = sphi 0, %s59
    %s81 = sphi 0, %s83
    %s84 = sphi 0, %s81
    %s85 = sphi 0, %s84
    %s101 = sphi 0, %s85
  $region4: #{transformer_forward.10} parent=0 // loop_header_branch
    %11 = sbr.rel (%p9) target = $region8
  $region5: #{transformer_forward.10} parent=0 // loop_body
    %s13 = ssub.s32 %s8, 1
    %s14 = ssub.s32 %s8, 2
    %s21 = sadd.s32 1, %s16
    %p22 = scmp.ge.s32.totalorder %s21, 2
    %s23 = scalar_select %p22, 0, %s21
    %s24 = sadd.s32 1, %s15
    %s25 = scalar_select %p22, %s24, %s15
    %p26 = scmp.ge.s32.totalorder %s25, 2
    %s27 = scalar_select %p26, 0, %s25
    %s28 = ssub.s32 %s15, %s27
    %s29 = ssub.s32 %s16, %s23
    %s30 = sor.u32 %s28, %s29
    %p31 = scmp.eq.s32.totalorder %s30, 0
    %s33 = sadd.s32 %s32, 1
    %s34 = scalar_select %p31, %s32, %s33
    %p37 = pneg %p31
    %p38 = scmp.eq.s32.totalorder %s8, 3
    %p39 = por %p37, %p38
    %p40 = scmp.ne.s32.totalorder %s32, %s35
    %p41 = scmp.eq.s32.totalorder %s8, 0
    %p42 = por %p40, %p41
    %p43 = scmp.ne.s32.totalorder %s32, %s35
    %p44 = scmp.eq.s32.totalorder %s13, 3
    %p45 = por %p43, %p44
    %p46 = scmp.ne.s32.totalorder %s35, %s36
    %p47 = scmp.eq.s32.totalorder %s13, 0
    %p48 = por %p46, %p47
    %p49 = scmp.ne.s32.totalorder %s35, %s36
    %p50 = scmp.eq.s32.totalorder %s14, 3
    %p51 = por %p49, %p50
    %p53 = scmp.ne.s32.totalorder %s36, %s52
    %p54 = scmp.eq.s32.totalorder %s14, 0
    %p55 = por %p53, %p54
    %s57 = sadd.s32 %s56, 1
    %p60 = scmp.eq.s32.totalorder %s8, 3
    %p61 = scmp.ne.s32.totalorder %s56, %s58
    %p62 = scmp.eq.s32.totalorder %s8, 0
    %p63 = por %p61, %p62
    %p64 = scmp.ne.s32.totalorder %s56, %s58
    %p65 = scmp.eq.s32.totalorder %s13, 3
    %p66 = por %p64, %p65
    %p67 = scmp.ne.s32.totalorder %s58, %s59
    %p68 = scmp.eq.s32.totalorder %s13, 0
    %p69 = por %p67, %p68
    %p70 = scmp.ne.s32.totalorder %s58, %s59
    %p71 = scmp.eq.s32.totalorder %s14, 3
    %p72 = por %p70, %p71
    %p74 = scmp.ne.s32.totalorder %s59, %s73
    %p75 = scmp.eq.s32.totalorder %s14, 0
    %p76 = por %p74, %p75
    %s77 = ssub.s32 %s15, %s27
    %s78 = ssub.s32 %s16, %s23
    %s79 = sor.u32 %s77, %s78
    %p80 = scmp.eq.s32.totalorder %s79, 0
    %s82 = sadd.s32 %s81, 1
    %s83 = scalar_select %p80, %s81, %s82
    %p86 = pneg %p80
    %p87 = scmp.eq.s32.totalorder %s8, 3
    %p88 = por %p86, %p87
    %p89 = scmp.ne.s32.totalorder %s81, %s84
    %p90 = scmp.eq.s32.totalorder %s8, 0
    %p91 = por %p89, %p90
    %p92 = scmp.ne.s32.totalorder %s81, %s84
    %p93 = scmp.eq.s32.totalorder %s13, 3
    %p94 = por %p92, %p93
    %p95 = scmp.ne.s32.totalorder %s84, %s85
    %p96 = scmp.eq.s32.totalorder %s13, 0
    %p97 = por %p95, %p96
    %p98 = scmp.ne.s32.totalorder %s84, %s85
    %p99 = scmp.eq.s32.totalorder %s14, 3
    %p100 = por %p98, %p99
    %p102 = scmp.ne.s32.totalorder %s85, %s101
    %p103 = scmp.eq.s32.totalorder %s14, 0
    %p104 = por %p102, %p103
    %p105 = scmp.le.s32.totalorder 1, %s8
    %p106 = scmp.lt.s32.totalorder %s8, 5
    %p107 = pnand %p105, %p106
    %p108 = pneg %p107
    // Predicated region
    $region9: #{transformer_forward.10} parent=5 // pred_check
      _
    $region10: #{transformer_forward.10} parent=5 // pred_check_branch
      %110 = sbr.rel (%p107) target = $region12
    $region11: #{transformer_forward.10} parent=5 // pred_region
      %s111 = ssub.s32 %s8, 1
      // Predicated region
      $region13: #{transformer_forward.10} parent=11 // pred_check
        %p112 = pneg %p69
      $region14: #{transformer_forward.10} parent=11 // pred_check_branch
        %114 = sbr.rel (%p112) target = $region16
      $region15: #{transformer_forward.10} parent=11 // pred_region
        _
      $region16: #{transformer_forward.10} parent=11 // pred_fallthru
        _
    $region12: #{transformer_forward.10} parent=5 // pred_fallthru
      _
    %p115 = scmp.lt.s32.totalorder %s8, 4
    // Predicated region
    $region17: #{transformer_forward.10} parent=5 // pred_check
      %p116 = pneg %p115
    $region18: #{transformer_forward.10} parent=5 // pred_check_branch
      %118 = sbr.rel (%p116) target = $region20
    $region19: #{transformer_forward.10} parent=5 // pred_region
      // Predicated region
      $region21: #{transformer_forward.10} parent=19 // pred_check
        %p119 = pneg %p42
      $region22: #{transformer_forward.10} parent=19 // pred_check_branch
        %121 = sbr.rel (%p119) target = $region24
      $region23: #{transformer_forward.10} parent=19 // pred_region
        %p122 = scmp.lt.s32.totalorder %s15, 1
        %s123 = scalar_select %p122, %s15, 1
        %p124 = scmp.lt.s32.totalorder %s16, 1
        %s125 = scalar_select %p124, %s16, 1
        %s126 = smul.addr %s123, 2
        %s127 = sadd.s32 %s125, %s126
        %s128 = smul.addr %s127, 4
        %s129 = scalar_lea.vmem %s0, %s128
      $region24: #{transformer_forward.10} parent=19 // pred_fallthru
        _
    $region20: #{transformer_forward.10} parent=5 // pred_fallthru
      _
    %p130 = scmp.le.s32.totalorder 1, %s8
    %p131 = scmp.lt.s32.totalorder %s8, 5
    %p132 = pnand %p130, %p131
    %p133 = pneg %p132
    // Predicated region
    $region25: #{transformer_forward.10} parent=5 // pred_check
      _
    $region26: #{transformer_forward.10} parent=5 // pred_check_branch
      %135 = sbr.rel (%p132) target = $region28
    $region27: #{transformer_forward.10} parent=5 // pred_region
      %s136 = ssub.s32 %s8, 1
      %p137 = scmp.lt.s32.totalorder %s17, 1
      %s138 = scalar_select %p137, %s17, 1
      %p139 = scmp.lt.s32.totalorder %s18, 1
      %s140 = scalar_select %p139, %s18, 1
      %s141 = smul.addr %s138, 2
      %s142 = sadd.s32 %s140, %s141
      %s143 = smul.addr %s142, 4
      %s144 = scalar_lea.vmem %s0, %s143
      %p145 = pneg %p48
      %p146 = pneg %p45
      %p147 = pneg %p69
      %p148 = pneg %p66
      %p149 = pneg %p97
      %p150 = pneg %p94
      %p151 = scmp.lt.s32.totalorder %s17, 1
      %s152 = scalar_select %p151, %s17, 1
      %p153 = scmp.lt.s32.totalorder %s18, 1
      %s154 = scalar_select %p153, %s18, 1
      %s155 = smul.addr %s152, 2
      %s156 = sadd.s32 %s154, %s155
      %s157 = smul.addr %s156, 4
      %s158 = scalar_lea.vmem %s2, %s157
      %p159 = scmp.lt.s32.totalorder %s17, 1
      %s160 = scalar_select %p159, %s17, 1
      %p161 = scmp.lt.s32.totalorder %s18, 1
      %s162 = scalar_select %p161, %s18, 1
      %s163 = smul.addr %s160, 2
      %s164 = sadd.s32 %s162, %s163
      %s165 = smul.addr %s164, 4
      %s166 = scalar_lea.vmem %s0, %s165
      %p167 = scmp.lt.s32.totalorder %s17, 1
      %s168 = scalar_select %p167, %s17, 1
      %p169 = scmp.lt.s32.totalorder %s18, 1
      %s170 = scalar_select %p169, %s18, 1
      %s171 = smul.addr %s168, 2
      %s172 = sadd.s32 %s170, %s171
      %s173 = smul.addr %s172, 4
      %s174 = scalar_lea.vmem %s2, %s173
      %v176 = vld [vmem:[%s166] sm:$0xf]
      %v178 = vunpack.c.l.b16 %v176
      %v179 = vpack.c.b16 %v178, %v178
      %180 = vrot.lane.b32.xlu0 %v179, 112
      %v181 = vpop.permute.xlu0 %180
      %vm182 = vcmask 130048
      %v184 = vsel %vm182, %v176, 0
      %v187 = vsel %vm182, %v181, 0
      %189 = vmatprep.subr.bf16.mxu0 0
      %190 = vmatpush1.bf16.xpose.msra.mxu0 %v187
      %191 = vmatprep.subr.bf16.mxu0 0
      %192 = vmatpush1.bf16.xpose.msra.mxu0 0
      %193 = vmatprep.subr.bf16.mxu0 0
      %194 = vmatpush1.bf16.xpose.msra.mxu0 0
      %195 = vmatprep.subr.bf16.mxu0 0
      %196 = vmatpush1.bf16.xpose.msra.mxu0 0
      %197 = vmatprep.subr.bf16.mxu0 0
      %198 = vmatpush1.bf16.xpose.msra.mxu0 0
      %199 = vmatprep.subr.bf16.mxu0 0
      %200 = vmatpush1.bf16.xpose.msra.mxu0 0
      %201 = vmatprep.subr.bf16.mxu0 0
      %202 = vmatpush1.bf16.xpose.msra.mxu0 0
      %203 = vmatprep.subr.bf16.mxu0 0
      %204 = vmatpush1.bf16.xpose.msra.mxu0 0
      %205 = vmatprep.subr.bf16.mxu0 0
      %206 = vmatpush1.bf16.xpose.msra.mxu0 0
      %207 = vmatprep.subr.bf16.mxu0 0
      %208 = vmatpush1.bf16.xpose.msra.mxu0 0
      %209 = vmatprep.subr.bf16.mxu0 0
      %210 = vmatpush1.bf16.xpose.msra.mxu0 0
      %211 = vmatprep.subr.bf16.mxu0 0
      %212 = vmatpush1.bf16.xpose.msra.mxu0 0
      %213 = vmatprep.subr.bf16.mxu0 0
      %214 = vmatpush1.bf16.xpose.msra.mxu0 0
      %215 = vmatprep.subr.bf16.mxu0 0
      %216 = vmatpush1.bf16.xpose.msra.mxu0 0
      %217 = vmatprep.subr.bf16.mxu0 0
      %218 = vmatpush1.bf16.xpose.msra.mxu0 0
      %219 = vmatprep.subr.bf16.mxu0 0
      %220 = vmatpush1.bf16.xpose.msra.mxu0 0
      %221 = vmatprep.mubr.bf16.mxu0 0
      %222 = vmatmul.mubr.bf16.gmra.mrb[0].mxu0 %v184
      %v223 = vpop.f32.mrb[0].mxu0
      %v224 = vadd.f32 0.0, %v223
      %v225 = vpop.f32.mrb[0].mxu0
      %v226 = vpop.f32.mrb[0].mxu0
      %v227 = vpop.f32.mrb[0].mxu0
      %228 = vdwg.mxu0
      %v229 = vmul.f32 %v224, 0.25
      %v230 = vld [vmem:[%s1] sm:$0xff]
      %v231 = vadd.f32 %v229, %v230
      %vm232 = vcmask 64512
      %v233 = vsel %vm232, %v231, -inf
      %234 = vmax.xlane.f32.xlu0 %v233
      %v235 = vpop.xlane.xlu0 %234
      %v236 = vsub.f32 %v231, %v235
      %v237 = vmul.f32 %v236, 1.442695
      %v238 = vpow.pop %v237
      %v239 = vsel %vm232, %v238, 0.0
      %240 = vadd.xlane.f32.xlu0 %v239
      %v241 = vpop.xlane.xlu0 %240
      %v242 = vrcp.pop %v241
      %v243 = vmul.f32 %v238, %v242
      %v244 = vpack.c.bf16 %v243, %v243
      %245 = vrot.lane.b32.xlu0 %v179, 96
      %v246 = vpop.permute.xlu0 %245
      %v248 = vsel %vm232, %v244, 0
      %vm250 = vcmask 1043456
      %v252 = vsel %vm250, %v246, 0
      %254 = vmatprep.subr.bf16.mxu0 0
      %255 = vmatpush1.bf16.msra.mxu0 %v252
      %256 = vmatprep.subr.bf16.mxu0 0
      %257 = vmatpush1.bf16.msra.mxu0 0
      %258 = vmatprep.subr.bf16.mxu0 0
      %259 = vmatpush1.bf16.msra.mxu0 0
      %260 = vmatprep.subr.bf16.mxu0 0
      %261 = vmatpush1.bf16.msra.mxu0 0
      %262 = vmatprep.subr.bf16.mxu0 0
      %263 = vmatpush1.bf16.msra.mxu0 0
      %264 = vmatprep.subr.bf16.mxu0 0
      %265 = vmatpush1.bf16.msra.mxu0 0
      %266 = vmatprep.subr.bf16.mxu0 0
      %267 = vmatpush1.bf16.msra.mxu0 0
      %268 = vmatprep.subr.bf16.mxu0 0
      %269 = vmatpush1.bf16.msra.mxu0 0
      %270 = vmatprep.subr.bf16.mxu0 0
      %271 = vmatpush1.bf16.msra.mxu0 0
      %272 = vmatprep.subr.bf16.mxu0 0
      %273 = vmatpush1.bf16.msra.mxu0 0
      %274 = vmatprep.subr.bf16.mxu0 0
      %275 = vmatpush1.bf16.msra.mxu0 0
      %276 = vmatprep.subr.bf16.mxu0 0
      %277 = vmatpush1.bf16.msra.mxu0 0
      %278 = vmatprep.subr.bf16.mxu0 0
      %279 = vmatpush1.bf16.msra.mxu0 0
      %280 = vmatprep.subr.bf16.mxu0 0
      %281 = vmatpush1.bf16.msra.mxu0 0
      %282 = vmatprep.subr.bf16.mxu0 0
      %283 = vmatpush1.bf16.msra.mxu0 0
      %284 = vmatprep.subr.bf16.mxu0 0
      %285 = vmatpush1.bf16.msra.mxu0 0
      %286 = vmatprep.mubr.bf16.mxu0 0
      %287 = vmatmul.mubr.bf16.gmra.mrb[0].mxu0 %v248
      %v288 = vpop.f32.mrb[0].mxu0
      %v289 = vadd.f32 0.0, %v288
      %v290 = vpop.f32.mrb[0].mxu0
      %v291 = vpop.f32.mrb[0].mxu0
      %v292 = vpop.f32.mrb[0].mxu0
      %293 = vdwg.mxu0
      %v294 = vpack.c.bf16 %v289, %v289
      %vm295 = vcmask 125952
      %296 = vst.msk [vmem:[%s174] sm:$0xf] %vm295, %v294
      %p297 = scmp.lt.s32.totalorder %s17, 1
      %s298 = scalar_select %p297, %s17, 1
      %p299 = scmp.lt.s32.totalorder %s18, 1
      %s300 = scalar_select %p299, %s18, 1
      %s301 = smul.addr %s298, 2
      %s302 = sadd.s32 %s300, %s301
      %s303 = smul.addr %s302, 4
      %s304 = scalar_lea.vmem %s2, %s303
      // Predicated region
      $region29: #{transformer_forward.10} parent=27 // pred_check
        %p305 = pneg %p94
      $region30: #{transformer_forward.10} parent=27 // pred_check_branch
        %307 = sbr.rel (%p305) target = $region32
      $region31: #{transformer_forward.10} parent=27 // pred_region
        _
      $region32: #{transformer_forward.10} parent=27 // pred_fallthru
        _
    $region28: #{transformer_forward.10} parent=5 // pred_fallthru
      _
    %p308 = scmp.le.s32.totalorder 2, %s8
    // Predicated region
    $region33: #{transformer_forward.10} parent=5 // pred_check
      %p309 = pneg %p308
    $region34: #{transformer_forward.10} parent=5 // pred_check_branch
      %311 = sbr.rel (%p309) target = $region36
    $region35: #{transformer_forward.10} parent=5 // pred_region
      %s312 = ssub.s32 %s8, 2
      // Predicated region
      $region37: #{transformer_forward.10} parent=35 // pred_check
        %p313 = pneg %p100
      $region38: #{transformer_forward.10} parent=35 // pred_check_branch
        %315 = sbr.rel (%p313) target = $region40
      $region39: #{transformer_forward.10} parent=35 // pred_region
        %p316 = scmp.lt.s32.totalorder %s19, 1
        %s317 = scalar_select %p316, %s19, 1
        %p318 = scmp.lt.s32.totalorder %s20, 1
        %s319 = scalar_select %p318, %s20, 1
        %s320 = smul.addr %s317, 2
        %s321 = sadd.s32 %s319, %s320
        %s322 = smul.addr %s321, 4
        %s323 = scalar_lea.vmem %s2, %s322
      $region40: #{transformer_forward.10} parent=35 // pred_fallthru
        _
    $region36: #{transformer_forward.10} parent=5 // pred_fallthru
      _
  $region6: #{transformer_forward.10} parent=0 // loop_footer
    %s12 = sadd.s32 1, %s8
  $region7: #{transformer_forward.10} parent=0 // loop_footer_branch
    %7 = sbr.rel target = $region3
  $region8: #{transformer_forward.10} parent=0 // loop_exit
    _

// kernel: transformer_forward.9
$region0: #{transformer_forward.9}
  #allocation0 [shape = 'u32[]', space=smem, size = 0x4, offset = 0x4, fixed_abs, tag = 'smem constant byte address 0x4 - core index']
  #allocation1 [shape = 'u32[144,128]{1,0:T(1,128)}', space=vmem, size = 0x12000, scoped, tag = 'internal scratch']
  #allocation2 [shape = 'f32[8,48]{1,0:T(8,128)}', space=vmem, size = 0x1000, scoped, tag = 'scratch operand']
  %s0 = inlined_call_operand.vmem [shape: bf16[2,8,32], index: 0, kind: input, shape index: {}]
  %s1 = inlined_call_operand.vmem [shape: bf16[2,32,48], index: 1, kind: input, shape index: {}]
  %s2 = inlined_call_operand.vmem [shape: f32[2,1,48], index: 2, kind: input, shape index: {}]
  %s3 = inlined_call_operand.vmem [shape: bf16[2,2,8,48], index: 3, kind: output, shape index: {}]
  %s4 = sld [smem:[#allocation0]]
  $region53: #{transformer_forward.9} parent=0
    _
  %s6 = ssub.s32 1, %s4
  %s7 = scalar_select 0, %s6, %s4
  loop: start=0, step=1, limit=6
  $region2: #{transformer_forward.9} parent=0 // loop_pre_header
    _
  $region3: #{transformer_forward.9} parent=0 // loop_header
    %s9 = sphi 0, %s13
    %p10 = scmp.ge.s32.totalorder %s9, 6
    %s16 = sphi 0, %s35
    %s17 = sphi 0, %s31
    %s18 = sphi 0, %s27
    %s19 = sphi 0, %s16
    %s20 = sphi 0, %s17
    %s21 = sphi 0, %s18
    %s22 = sphi 0, %s19
    %s23 = sphi 0, %s20
    %s24 = sphi 0, %s21
    %s40 = sphi 0, %s42
    %s43 = sphi 0, %s40
    %s44 = sphi 0, %s43
    %s60 = sphi 0, %s44
    %s68 = sphi 0, %s70
    %s71 = sphi 0, %s68
    %s72 = sphi 0, %s71
    %s88 = sphi 0, %s72
    %s94 = sphi 0, %s96
    %s97 = sphi 0, %s94
    %s98 = sphi 0, %s97
    %s114 = sphi 0, %s98
    %s122 = sphi 0, %s124
    %s125 = sphi 0, %s122
    %s126 = sphi 0, %s125
    %s142 = sphi 0, %s126
  $region4: #{transformer_forward.9} parent=0 // loop_header_branch
    %12 = sbr.rel (%p10) target = $region8
  $region5: #{transformer_forward.9} parent=0 // loop_body
    %s14 = ssub.s32 %s9, 1
    %s15 = ssub.s32 %s9, 2
    %s25 = sadd.s32 1, %s18
    %p26 = scmp.ge.s32.totalorder %s25, 1
    %s27 = scalar_select %p26, 0, %s25
    %s28 = sadd.s32 1, %s17
    %s29 = scalar_select %p26, %s28, %s17
    %p30 = scmp.ge.s32.totalorder %s29, 2
    %s31 = scalar_select %p30, 0, %s29
    %s32 = sadd.s32 1, %s16
    %s33 = scalar_select %p30, %s32, %s16
    %p34 = scmp.ge.s32.totalorder %s33, 2
    %s35 = scalar_select %p34, 0, %s33
    %s36 = ssub.s32 %s16, %s35
    %s37 = ssub.s32 %s18, %s27
    %s38 = sor.u32 %s36, %s37
    %p39 = scmp.eq.s32.totalorder %s38, 0
    %s41 = sadd.s32 %s40, 1
    %s42 = scalar_select %p39, %s40, %s41
    %p45 = pneg %p39
    %p46 = scmp.eq.s32.totalorder %s9, 3
    %p47 = por %p45, %p46
    %p48 = scmp.ne.s32.totalorder %s40, %s43
    %p49 = scmp.eq.s32.totalorder %s9, 0
    %p50 = por %p48, %p49
    %p51 = scmp.ne.s32.totalorder %s40, %s43
    %p52 = scmp.eq.s32.totalorder %s14, 3
    %p53 = por %p51, %p52
    %p54 = scmp.ne.s32.totalorder %s43, %s44
    %p55 = scmp.eq.s32.totalorder %s14, 0
    %p56 = por %p54, %p55
    %p57 = scmp.ne.s32.totalorder %s43, %s44
    %p58 = scmp.eq.s32.totalorder %s15, 3
    %p59 = por %p57, %p58
    %p61 = scmp.ne.s32.totalorder %s44, %s60
    %p62 = scmp.eq.s32.totalorder %s15, 0
    %p63 = por %p61, %p62
    %s64 = ssub.s32 %s17, %s31
    %s65 = ssub.s32 %s18, %s27
    %s66 = sor.u32 %s64, %s65
    %p67 = scmp.eq.s32.totalorder %s66, 0
    %s69 = sadd.s32 %s68, 1
    %s70 = scalar_select %p67, %s68, %s69
    %p73 = pneg %p67
    %p74 = scmp.eq.s32.totalorder %s9, 3
    %p75 = por %p73, %p74
    %p76 = scmp.ne.s32.totalorder %s68, %s71
    %p77 = scmp.eq.s32.totalorder %s9, 0
    %p78 = por %p76, %p77
    %p79 = scmp.ne.s32.totalorder %s68, %s71
    %p80 = scmp.eq.s32.totalorder %s14, 3
    %p81 = por %p79, %p80
    %p82 = scmp.ne.s32.totalorder %s71, %s72
    %p83 = scmp.eq.s32.totalorder %s14, 0
    %p84 = por %p82, %p83
    %p85 = scmp.ne.s32.totalorder %s71, %s72
    %p86 = scmp.eq.s32.totalorder %s15, 3
    %p87 = por %p85, %p86
    %p89 = scmp.ne.s32.totalorder %s72, %s88
    %p90 = scmp.eq.s32.totalorder %s15, 0
    %p91 = por %p89, %p90
    %s92 = ssub.s32 %s17, %s31
    %p93 = scmp.eq.s32.totalorder %s92, 0
    %s95 = sadd.s32 %s94, 1
    %s96 = scalar_select %p93, %s94, %s95
    %p99 = pneg %p93
    %p100 = scmp.eq.s32.totalorder %s9, 3
    %p101 = por %p99, %p100
    %p102 = scmp.ne.s32.totalorder %s94, %s97
    %p103 = scmp.eq.s32.totalorder %s9, 0
    %p104 = por %p102, %p103
    %p105 = scmp.ne.s32.totalorder %s94, %s97
    %p106 = scmp.eq.s32.totalorder %s14, 3
    %p107 = por %p105, %p106
    %p108 = scmp.ne.s32.totalorder %s97, %s98
    %p109 = scmp.eq.s32.totalorder %s14, 0
    %p110 = por %p108, %p109
    %p111 = scmp.ne.s32.totalorder %s97, %s98
    %p112 = scmp.eq.s32.totalorder %s15, 3
    %p113 = por %p111, %p112
    %p115 = scmp.ne.s32.totalorder %s98, %s114
    %p116 = scmp.eq.s32.totalorder %s15, 0
    %p117 = por %p115, %p116
    %s118 = ssub.s32 %s16, %s35
    %s119 = ssub.s32 %s17, %s31
    %s120 = sor.u32 %s118, %s119
    %p121 = scmp.eq.s32.totalorder %s120, 0
    %s123 = sadd.s32 %s122, 1
    %s124 = scalar_select %p121, %s122, %s123
    %p127 = pneg %p121
    %p128 = scmp.eq.s32.totalorder %s9, 3
    %p129 = por %p127, %p128
    %p130 = scmp.ne.s32.totalorder %s122, %s125
    %p131 = scmp.eq.s32.totalorder %s9, 0
    %p132 = por %p130, %p131
    %p133 = scmp.ne.s32.totalorder %s122, %s125
    %p134 = scmp.eq.s32.totalorder %s14, 3
    %p135 = por %p133, %p134
    %p136 = scmp.ne.s32.totalorder %s125, %s126
    %p137 = scmp.eq.s32.totalorder %s14, 0
    %p138 = por %p136, %p137
    %p139 = scmp.ne.s32.totalorder %s125, %s126
    %p140 = scmp.eq.s32.totalorder %s15, 3
    %p141 = por %p139, %p140
    %p143 = scmp.ne.s32.totalorder %s126, %s142
    %p144 = scmp.eq.s32.totalorder %s15, 0
    %p145 = por %p143, %p144
    %p146 = scmp.le.s32.totalorder 1, %s9
    %p147 = scmp.lt.s32.totalorder %s9, 5
    %p148 = pnand %p146, %p147
    %p149 = pneg %p148
    // Predicated region
    $region9: #{transformer_forward.9} parent=5 // pred_check
      _
    $region10: #{transformer_forward.9} parent=5 // pred_check_branch
      %151 = sbr.rel (%p148) target = $region12
    $region11: #{transformer_forward.9} parent=5 // pred_region
      %s152 = ssub.s32 %s9, 1
    $region12: #{transformer_forward.9} parent=5 // pred_fallthru
      _
    %p153 = scmp.lt.s32.totalorder %s9, 4
    // Predicated region
    $region13: #{transformer_forward.9} parent=5 // pred_check
      %p154 = pneg %p153
    $region14: #{transformer_forward.9} parent=5 // pred_check_branch
      %156 = sbr.rel (%p154) target = $region16
    $region15: #{transformer_forward.9} parent=5 // pred_region
      // Predicated region
      $region17: #{transformer_forward.9} parent=15 // pred_check
        %p157 = pneg %p50
      $region18: #{transformer_forward.9} parent=15 // pred_check_branch
        %159 = sbr.rel (%p157) target = $region20
      $region19: #{transformer_forward.9} parent=15 // pred_region
        %p160 = scmp.lt.s32.totalorder %s16, 1
        %s161 = scalar_select %p160, %s16, 1
        %p162 = scmp.lt.s32.totalorder %s18, 0
        %s163 = scalar_select %p162, %s18, 0
        %s164 = sadd.s32 %s163, %s161
        %s165 = smul.addr %s164, 4
        %s166 = scalar_lea.vmem %s0, %s165
      $region20: #{transformer_forward.9} parent=15 // pred_fallthru
        _
      // Predicated region
      $region21: #{transformer_forward.9} parent=15 // pred_check
        %p167 = pneg %p78
      $region22: #{transformer_forward.9} parent=15 // pred_check_branch
        %169 = sbr.rel (%p167) target = $region24
      $region23: #{transformer_forward.9} parent=15 // pred_region
        %s170 = smul.u32 4, %s18
        %p171 = scmp.lt.s32.totalorder %s17, 1
        %s172 = scalar_select %p171, %s17, 1
        %p173 = scmp.lt.s32.totalorder %s170, 3
        %s174 = scalar_select %p173, %s170, 3
        %s175 = smul.addr %s172, 4
        %s176 = sadd.s32 %s174, %s175
        %s177 = smul.addr %s176, 4
        %s178 = scalar_lea.vmem %s1, %s177
        %s179 = smul.u32 4, %s18
      $region24: #{transformer_forward.9} parent=15 // pred_fallthru
        _
      // Predicated region
      $region25: #{transformer_forward.9} parent=15 // pred_check
        %p180 = pneg %p104
      $region26: #{transformer_forward.9} parent=15 // pred_check_branch
        %182 = sbr.rel (%p180) target = $region28
      $region27: #{transformer_forward.9} parent=15 // pred_region
        %p183 = scmp.lt.s32.totalorder %s17, 1
        %s184 = scalar_select %p183, %s17, 1
        %s185 = scalar_lea.vmem %s2, %s184
      $region28: #{transformer_forward.9} parent=15 // pred_fallthru
        _
    $region16: #{transformer_forward.9} parent=5 // pred_fallthru
      _
    %p186 = scmp.le.s32.totalorder 1, %s9
    %p187 = scmp.lt.s32.totalorder %s9, 5
    %p188 = pnand %p186, %p187
    %p189 = pneg %p188
    // Predicated region
    $region29: #{transformer_forward.9} parent=5 // pred_check
      _
    $region30: #{transformer_forward.9} parent=5 // pred_check_branch
      %191 = sbr.rel (%p188) target = $region32
    $region31: #{transformer_forward.9} parent=5 // pred_region
      %s192 = ssub.s32 %s9, 1
      %p193 = scmp.lt.s32.totalorder %s19, 1
      %s194 = scalar_select %p193, %s19, 1
      %p195 = scmp.lt.s32.totalorder %s21, 0
      %s196 = scalar_select %p195, %s21, 0
      %s197 = sadd.s32 %s196, %s194
      %s198 = smul.addr %s197, 4
      %s199 = scalar_lea.vmem %s0, %s198
      %p200 = pneg %p56
      %p201 = pneg %p53
      %s202 = smul.u32 4, %s21
      %p203 = scmp.lt.s32.totalorder %s20, 1
      %s204 = scalar_select %p203, %s20, 1
      %p205 = scmp.lt.s32.totalorder %s202, 3
      %s206 = scalar_select %p205, %s202, 3
      %s207 = smul.addr %s204, 4
      %s208 = sadd.s32 %s206, %s207
      %s209 = smul.addr %s208, 4
      %s210 = scalar_lea.vmem %s1, %s209
      %p211 = pneg %p84
      %p212 = pneg %p81
      %p213 = scmp.lt.s32.totalorder %s20, 1
      %s214 = scalar_select %p213, %s20, 1
      %s215 = scalar_lea.vmem %s2, %s214
      %p216 = pneg %p110
      %p217 = pneg %p107
      %p218 = pneg %p138
      %p219 = pneg %p135
      %p220 = scmp.lt.s32.totalorder %s19, 1
      %s221 = scalar_select %p220, %s19, 1
      %p222 = scmp.lt.s32.totalorder %s20, 1
      %s223 = scalar_select %p222, %s20, 1
      %s224 = smul.addr %s221, 2
      %s225 = sadd.s32 %s223, %s224
      %s226 = smul.addr %s225, 4
      %s227 = scalar_lea.vmem %s3, %s226
      %p228 = scmp.lt.s32.totalorder %s19, 1
      %s229 = scalar_select %p228, %s19, 1
      %p230 = scmp.lt.s32.totalorder %s21, 0
      %s231 = scalar_select %p230, %s21, 0
      %s232 = sadd.s32 %s231, %s229
      %s233 = smul.addr %s232, 4
      %s234 = scalar_lea.vmem %s0, %s233
      %s235 = smul.u32 4, %s21
      %p236 = scmp.lt.s32.totalorder %s20, 1
      %s237 = scalar_select %p236, %s20, 1
      %p238 = scmp.lt.s32.totalorder %s235, 3
      %s239 = scalar_select %p238, %s235, 3
      %s240 = smul.addr %s237, 4
      %s241 = sadd.s32 %s239, %s240
      %s242 = smul.addr %s241, 4
      %s243 = scalar_lea.vmem %s1, %s242
      %s244 = smul.u32 4, %s21
      %p245 = scmp.lt.s32.totalorder %s20, 1
      %s246 = scalar_select %p245, %s20, 1
      %s247 = scalar_lea.vmem %s2, %s246
      %p248 = scmp.lt.s32.totalorder %s19, 1
      %s249 = scalar_select %p248, %s19, 1
      %p250 = scmp.lt.s32.totalorder %s20, 1
      %s251 = scalar_select %p250, %s20, 1
      %s252 = smul.addr %s249, 2
      %s253 = sadd.s32 %s251, %s252
      %s254 = smul.addr %s253, 4
      %s255 = scalar_lea.vmem %s3, %s254
      %p257 = scmp.eq.s32.totalorder %s21, 0
      // Predicated region
      $region33: #{transformer_forward.9} parent=31 // pred_check
        %p258 = pneg %p257
      $region34: #{transformer_forward.9} parent=31 // pred_check_branch
        %260 = sbr.rel (%p258) target = $region36
      $region35: #{transformer_forward.9} parent=31 // pred_region
        %vm261 = vcmask 392192
        %262 = vst.msk [vmem:[#allocation2] sm:$0xff] %vm261, 0.0
      $region36: #{transformer_forward.9} parent=31 // pred_fallthru
        _
      %v263 = vld [vmem:[#allocation2] sm:$0xff]
      %v264 = vld [vmem:[%s234] sm:$0xf]
      %v265 = vld [vmem:[%s243] sm:$0xf]
      %v266 = vld [vmem:[%s243 + $0x4] sm:$0xf]
      %v267 = vld [vmem:[%s243 + $0x8] sm:$0xf]
      %v268 = vld [vmem:[%s243 + $0xc] sm:$0xf]
      %v273 = vunpack.c.l.b16 %v265
      %v274 = vunpack.c.l.b16 %v266
      %v275 = vunpack.c.l.b16 %v267
      %v276 = vunpack.c.l.b16 %v268
      %v277 = vpack.c.b16 %v274, %v273
      %v278 = vpack.c.b16 %v276, %v275
      %vm281 = vcmask 261120
      %v283 = vsel %vm281, %v264, 0
      %285 = vmatprep.subr.bf16.mxu0 0
      %286 = vmatpush1.bf16.msra.mxu0 %v277
      %287 = vmatprep.subr.bf16.mxu0 0
      %288 = vmatpush1.bf16.msra.mxu0 %v278
      %289 = vmatprep.subr.bf16.mxu0 0
      %290 = vmatpush1.bf16.msra.mxu0 0
      %291 = vmatprep.subr.bf16.mxu0 0
      %292 = vmatpush1.bf16.msra.mxu0 0
      %293 = vmatprep.subr.bf16.mxu0 0
      %294 = vmatpush1.bf16.msra.mxu0 0
      %295 = vmatprep.subr.bf16.mxu0 0
      %296 = vmatpush1.bf16.msra.mxu0 0
      %297 = vmatprep.subr.bf16.mxu0 0
      %298 = vmatpush1.bf16.msra.mxu0 0
      %299 = vmatprep.subr.bf16.mxu0 0
      %300 = vmatpush1.bf16.msra.mxu0 0
      %301 = vmatprep.subr.bf16.mxu0 0
      %302 = vmatpush1.bf16.msra.mxu0 0
      %303 = vmatprep.subr.bf16.mxu0 0
      %304 = vmatpush1.bf16.msra.mxu0 0
      %305 = vmatprep.subr.bf16.mxu0 0
      %306 = vmatpush1.bf16.msra.mxu0 0
      %307 = vmatprep.subr.bf16.mxu0 0
      %308 = vmatpush1.bf16.msra.mxu0 0
      %309 = vmatprep.subr.bf16.mxu0 0
      %310 = vmatpush1.bf16.msra.mxu0 0
      %311 = vmatprep.subr.bf16.mxu0 0
      %312 = vmatpush1.bf16.msra.mxu0 0
      %313 = vmatprep.subr.bf16.mxu0 0
      %314 = vmatpush1.bf16.msra.mxu0 0
      %315 = vmatprep.subr.bf16.mxu0 0
      %316 = vmatpush1.bf16.msra.mxu0 0
      %317 = vmatprep.mubr.bf16.mxu0 0
      %318 = vmatmul.mubr.bf16.gmra.mrb[0].mxu0 %v283
      %v319 = vpop.f32.mrb[0].mxu0
      %v320 = vadd.f32 0.0, %v319
      %v321 = vpop.f32.mrb[0].mxu0
      %v322 = vpop.f32.mrb[0].mxu0
      %v323 = vpop.f32.mrb[0].mxu0
      %324 = vdwg.mxu0
      %v325 = vadd.f32 %v263, %v320
      %vm326 = vcmask 392192
      %327 = vst.msk [vmem:[#allocation2] sm:$0xff] %vm326, %v325
      // Predicated region
      $region37: #{transformer_forward.9} parent=31 // pred_check
        %p328 = pneg %p257
      $region38: #{transformer_forward.9} parent=31 // pred_check_branch
        %330 = sbr.rel (%p328) target = $region40
      $region39: #{transformer_forward.9} parent=31 // pred_region
        %v331 = vld [vmem:[#allocation2] sm:$0xff]
        %v332 = vld [vmem:[%s247] sm:$0x1]
        %v334 = vlaneseq
        %v335 = vshrl.u32 %v334, 7
        %v336 = vsub.s32 0, %v335
        %v337 = vrot.slane %v332, %v336
        %v339 = vadd.f32 %v331, %v337
        %v340 = vpack.c.bf16 %v339, %v339
        %vm341 = vcmask 388096
        %342 = vst.msk [vmem:[%s255] sm:$0xf] %vm341, %v340
      $region40: #{transformer_forward.9} parent=31 // pred_fallthru
        _
      %p343 = scmp.lt.s32.totalorder %s19, 1
      %s344 = scalar_select %p343, %s19, 1
      %p345 = scmp.lt.s32.totalorder %s20, 1
      %s346 = scalar_select %p345, %s20, 1
      %s347 = smul.addr %s344, 2
      %s348 = sadd.s32 %s346, %s347
      %s349 = smul.addr %s348, 4
      %s350 = scalar_lea.vmem %s3, %s349
      // Predicated region
      $region41: #{transformer_forward.9} parent=31 // pred_check
        %p351 = pneg %p135
      $region42: #{transformer_forward.9} parent=31 // pred_check_branch
        %353 = sbr.rel (%p351) target = $region44
      $region43: #{transformer_forward.9} parent=31 // pred_region
        _
      $region44: #{transformer_forward.9} parent=31 // pred_fallthru
        _
    $region32: #{transformer_forward.9} parent=5 // pred_fallthru
      _
    %p354 = scmp.le.s32.totalorder 2, %s9
    // Predicated region
    $region45: #{transformer_forward.9} parent=5 // pred_check
      %p355 = pneg %p354
    $region46: #{transformer_forward.9} parent=5 // pred_check_branch
      %357 = sbr.rel (%p355) target = $region48
    $region47: #{transformer_forward.9} parent=5 // pred_region
      %s358 = ssub.s32 %s9, 2
      // Predicated region
      $region49: #{transformer_forward.9} parent=47 // pred_check
        %p359 = pneg %p141
      $region50: #{transformer_forward.9} parent=47 // pred_check_branch
        %361 = sbr.rel (%p359) target = $region52
      $region51: #{transformer_forward.9} parent=47 // pred_region
        %p362 = scmp.lt.s32.totalorder %s22, 1
        %s363 = scalar_select %p362, %s22, 1
        %p364 = scmp.lt.s32.totalorder %s23, 1
        %s365 = scalar_select %p364, %s23, 1
        %s366 = smul.addr %s363, 2
        %s367 = sadd.s32 %s365, %s366
        %s368 = smul.addr %s367, 4
        %s369 = scalar_lea.vmem %s3, %s368
      $region52: #{transformer_forward.9} parent=47 // pred_fallthru
        _
    $region48: #{transformer_forward.9} parent=5 // pred_fallthru
      _
  $region6: #{transformer_forward.9} parent=0 // loop_footer
    %s13 = sadd.s32 1, %s9
  $region7: #{transformer_forward.9} parent=0 // loop_footer_branch
    %8 = sbr.rel target = $region3
  $region8: #{transformer_forward.9} parent=0 // loop_exit
    _

// kernel: transformer_forward.11
$region0: #{transformer_forward.11}
  #allocation0 [shape = 'u32[]', space=smem, size = 0x4, offset = 0x4, fixed_abs, tag = 'smem constant byte address 0x4 - core index']
  #allocation1 [shape = 'u32[144,128]{1,0:T(1,128)}', space=vmem, size = 0x12000, scoped, tag = 'internal scratch']
  #allocation2 [shape = 'f32[8,32]{1,0:T(8,128)}', space=vmem, size = 0x1000, scoped, tag = 'scratch operand']
  %s0 = inlined_call_operand.vmem [shape: bf16[2,2,8,16], index: 0, kind: input, shape index: {}]
  %s1 = inlined_call_operand.vmem [shape: bf16[2,16,32], index: 1, kind: input, shape index: {}]
  %s2 = inlined_call_operand.vmem [shape: f32[1,32], index: 2, kind: input, shape index: {}]
  %s3 = inlined_call_operand.vmem [shape: bf16[2,8,32], index: 3, kind: input, shape index: {}]
  %s4 = inlined_call_operand.vmem [shape: f32[1,32], index: 4, kind: input, shape index: {}]
  %s5 = inlined_call_operand.vmem [shape: f32[1,32], index: 5, kind: input, shape index: {}]
  %s6 = inlined_call_operand.vmem [shape: bf16[2,8,32], index: 6, kind: output, shape index: {}]
  %s7 = sld [smem:[#allocation0]]
  $region65: #{transformer_forward.11} parent=0
    _
  %s9 = ssub.s32 1, %s7
  %s10 = scalar_select 0, %s9, %s7
  loop: start=0, step=1, limit=6
  $region2: #{transformer_forward.11} parent=0 // loop_pre_header
    _
  $region3: #{transformer_forward.11} parent=0 // loop_header
    %s12 = sphi 0, %s16
    %p13 = scmp.ge.s32.totalorder %s12, 6
    %s19 = sphi 0, %s38
    %s20 = sphi 0, %s34
    %s21 = sphi 0, %s30
    %s22 = sphi 0, %s19
    %s23 = sphi 0, %s20
    %s24 = sphi 0, %s21
    %s25 = sphi 0, %s22
    %s26 = sphi 0, %s23
    %s27 = sphi 0, %s24
    %s45 = sphi 0, %s47
    %s48 = sphi 0, %s45
    %s49 = sphi 0, %s48
    %s65 = sphi 0, %s49
    %s71 = sphi 0, %s73
    %s74 = sphi 0, %s71
    %s75 = sphi 0, %s74
    %s91 = sphi 0, %s75
    %s95 = sphi 0, %s95
    %s97 = sphi 0, %s95
    %s98 = sphi 0, %s97
    %s112 = sphi 0, %s98
    %s120 = sphi 0, %s122
    %s123 = sphi 0, %s120
    %s124 = sphi 0, %s123
    %s140 = sphi 0, %s124
    %s144 = sphi 0, %s144
    %s146 = sphi 0, %s144
    %s147 = sphi 0, %s146
    %s161 = sphi 0, %s147
    %s165 = sphi 0, %s165
    %s167 = sphi 0, %s165
    %s168 = sphi 0, %s167
    %s182 = sphi 0, %s168
    %s190 = sphi 0, %s192
    %s193 = sphi 0, %s190
    %s194 = sphi 0, %s193
    %s210 = sphi 0, %s194
  $region4: #{transformer_forward.11} parent=0 // loop_header_branch
    %15 = sbr.rel (%p13) target = $region8
  $region5: #{transformer_forward.11} parent=0 // loop_body
    %s17 = ssub.s32 %s12, 1
    %s18 = ssub.s32 %s12, 2
    %s28 = sadd.s32 1, %s21
    %p29 = scmp.ge.s32.totalorder %s28, 2
    %s30 = scalar_select %p29, 0, %s28
    %s31 = sadd.s32 1, %s20
    %s32 = scalar_select %p29, %s31, %s20
    %p33 = scmp.ge.s32.totalorder %s32, 1
    %s34 = scalar_select %p33, 0, %s32
    %s35 = sadd.s32 1, %s19
    %s36 = scalar_select %p33, %s35, %s19
    %p37 = scmp.ge.s32.totalorder %s36, 2
    %s38 = scalar_select %p37, 0, %s36
    %s39 = ssub.s32 %s19, %s38
    %s40 = ssub.s32 %s21, %s30
    %s41 = sor.u32 %s39, %s40
    %s42 = ssub.s32 %s20, %s34
    %s43 = sor.u32 %s41, %s42
    %p44 = scmp.eq.s32.totalorder %s43, 0
    %s46 = sadd.s32 %s45, 1
    %s47 = scalar_select %p44, %s45, %s46
    %p50 = pneg %p44
    %p51 = scmp.eq.s32.totalorder %s12, 3
    %p52 = por %p50, %p51
    %p53 = scmp.ne.s32.totalorder %s45, %s48
    %p54 = scmp.eq.s32.totalorder %s12, 0
    %p55 = por %p53, %p54
    %p56 = scmp.ne.s32.totalorder %s45, %s48
    %p57 = scmp.eq.s32.totalorder %s17, 3
    %p58 = por %p56, %p57
    %p59 = scmp.ne.s32.totalorder %s48, %s49
    %p60 = scmp.eq.s32.totalorder %s17, 0
    %p61 = por %p59, %p60
    %p62 = scmp.ne.s32.totalorder %s48, %s49
    %p63 = scmp.eq.s32.totalorder %s18, 3
    %p64 = por %p62, %p63
    %p66 = scmp.ne.s32.totalorder %s49, %s65
    %p67 = scmp.eq.s32.totalorder %s18, 0
    %p68 = por %p66, %p67
    %s69 = ssub.s32 %s21, %s30
    %p70 = scmp.eq.s32.totalorder %s69, 0
    %s72 = sadd.s32 %s71, 1
    %s73 = scalar_select %p70, %s71, %s72
    %p76 = pneg %p70
    %p77 = scmp.eq.s32.totalorder %s12, 3
    %p78 = por %p76, %p77
    %p79 = scmp.ne.s32.totalorder %s71, %s74
    %p80 = scmp.eq.s32.totalorder %s12, 0
    %p81 = por %p79, %p80
    %p82 = scmp.ne.s32.totalorder %s71, %s74
    %p83 = scmp.eq.s32.totalorder %s17, 3
    %p84 = por %p82, %p83
    %p85 = scmp.ne.s32.totalorder %s74, %s75
    %p86 = scmp.eq.s32.totalorder %s17, 0
    %p87 = por %p85, %p86
    %p88 = scmp.ne.s32.totalorder %s74, %s75
    %p89 = scmp.eq.s32.totalorder %s18, 3
    %p90 = por %p88, %p89
    %p92 = scmp.ne.s32.totalorder %s75, %s91
    %p93 = scmp.eq.s32.totalorder %s18, 0
    %p94 = por %p92, %p93
    %s96 = sadd.s32 %s95, 1
    %p99 = scmp.eq.s32.totalorder %s12, 3
    %p100 = scmp.ne.s32.totalorder %s95, %s97
    %p101 = scmp.eq.s32.totalorder %s12, 0
    %p102 = por %p100, %p101
    %p103 = scmp.ne.s32.totalorder %s95, %s97
    %p104 = scmp.eq.s32.totalorder %s17, 3
    %p105 = por %p103, %p104
    %p106 = scmp.ne.s32.totalorder %s97, %s98
    %p107 = scmp.eq.s32.totalorder %s17, 0
    %p108 = por %p106, %p107
    %p109 = scmp.ne.s32.totalorder %s97, %s98
    %p110 = scmp.eq.s32.totalorder %s18, 3
    %p111 = por %p109, %p110
    %p113 = scmp.ne.s32.totalorder %s98, %s112
    %p114 = scmp.eq.s32.totalorder %s18, 0
    %p115 = por %p113, %p114
    %s116 = ssub.s32 %s19, %s38
    %s117 = ssub.s32 %s20, %s34
    %s118 = sor.u32 %s116, %s117
    %p119 = scmp.eq.s32.totalorder %s118, 0
    %s121 = sadd.s32 %s120, 1
    %s122 = scalar_select %p119, %s120, %s121
    %p125 = pneg %p119
    %p126 = scmp.eq.s32.totalorder %s12, 3
    %p127 = por %p125, %p126
    %p128 = scmp.ne.s32.totalorder %s120, %s123
    %p129 = scmp.eq.s32.totalorder %s12, 0
    %p130 = por %p128, %p129
    %p131 = scmp.ne.s32.totalorder %s120, %s123
    %p132 = scmp.eq.s32.totalorder %s17, 3
    %p133 = por %p131, %p132
    %p134 = scmp.ne.s32.totalorder %s123, %s124
    %p135 = scmp.eq.s32.totalorder %s17, 0
    %p136 = por %p134, %p135
    %p137 = scmp.ne.s32.totalorder %s123, %s124
    %p138 = scmp.eq.s32.totalorder %s18, 3
    %p139 = por %p137, %p138
    %p141 = scmp.ne.s32.totalorder %s124, %s140
    %p142 = scmp.eq.s32.totalorder %s18, 0
    %p143 = por %p141, %p142
    %s145 = sadd.s32 %s144, 1
    %p148 = scmp.eq.s32.totalorder %s12, 3
    %p149 = scmp.ne.s32.totalorder %s144, %s146
    %p150 = scmp.eq.s32.totalorder %s12, 0
    %p151 = por %p149, %p150
    %p152 = scmp.ne.s32.totalorder %s144, %s146
    %p153 = scmp.eq.s32.totalorder %s17, 3
    %p154 = por %p152, %p153
    %p155 = scmp.ne.s32.totalorder %s146, %s147
    %p156 = scmp.eq.s32.totalorder %s17, 0
    %p157 = por %p155, %p156
    %p158 = scmp.ne.s32.totalorder %s146, %s147
    %p159 = scmp.eq.s32.totalorder %s18, 3
    %p160 = por %p158, %p159
    %p162 = scmp.ne.s32.totalorder %s147, %s161
    %p163 = scmp.eq.s32.totalorder %s18, 0
    %p164 = por %p162, %p163
    %s166 = sadd.s32 %s165, 1
    %p169 = scmp.eq.s32.totalorder %s12, 3
    %p170 = scmp.ne.s32.totalorder %s165, %s167
    %p171 = scmp.eq.s32.totalorder %s12, 0
    %p172 = por %p170, %p171
    %p173 = scmp.ne.s32.totalorder %s165, %s167
    %p174 = scmp.eq.s32.totalorder %s17, 3
    %p175 = por %p173, %p174
    %p176 = scmp.ne.s32.totalorder %s167, %s168
    %p177 = scmp.eq.s32.totalorder %s17, 0
    %p178 = por %p176, %p177
    %p179 = scmp.ne.s32.totalorder %s167, %s168
    %p180 = scmp.eq.s32.totalorder %s18, 3
    %p181 = por %p179, %p180
    %p183 = scmp.ne.s32.totalorder %s168, %s182
    %p184 = scmp.eq.s32.totalorder %s18, 0
    %p185 = por %p183, %p184
    %s186 = ssub.s32 %s19, %s38
    %s187 = ssub.s32 %s20, %s34
    %s188 = sor.u32 %s186, %s187
    %p189 = scmp.eq.s32.totalorder %s188, 0
    %s191 = sadd.s32 %s190, 1
    %s192 = scalar_select %p189, %s190, %s191
    %p195 = pneg %p189
    %p196 = scmp.eq.s32.totalorder %s12, 3
    %p197 = por %p195, %p196
    %p198 = scmp.ne.s32.totalorder %s190, %s193
    %p199 = scmp.eq.s32.totalorder %s12, 0
    %p200 = por %p198, %p199
    %p201 = scmp.ne.s32.totalorder %s190, %s193
    %p202 = scmp.eq.s32.totalorder %s17, 3
    %p203 = por %p201, %p202
    %p204 = scmp.ne.s32.totalorder %s193, %s194
    %p205 = scmp.eq.s32.totalorder %s17, 0
    %p206 = por %p204, %p205
    %p207 = scmp.ne.s32.totalorder %s193, %s194
    %p208 = scmp.eq.s32.totalorder %s18, 3
    %p209 = por %p207, %p208
    %p211 = scmp.ne.s32.totalorder %s194, %s210
    %p212 = scmp.eq.s32.totalorder %s18, 0
    %p213 = por %p211, %p212
    %p214 = scmp.le.s32.totalorder 1, %s12
    %p215 = scmp.lt.s32.totalorder %s12, 5
    %p216 = pnand %p214, %p215
    %p217 = pneg %p216
    // Predicated region
    $region9: #{transformer_forward.11} parent=5 // pred_check
      _
    $region10: #{transformer_forward.11} parent=5 // pred_check_branch
      %219 = sbr.rel (%p216) target = $region12
    $region11: #{transformer_forward.11} parent=5 // pred_region
      %s220 = ssub.s32 %s12, 1
      // Predicated region
      $region13: #{transformer_forward.11} parent=11 // pred_check
        %p221 = pneg %p108
      $region14: #{transformer_forward.11} parent=11 // pred_check_branch
        %223 = sbr.rel (%p221) target = $region16
      $region15: #{transformer_forward.11} parent=11 // pred_region
        _
      $region16: #{transformer_forward.11} parent=11 // pred_fallthru
        _
      // Predicated region
      $region17: #{transformer_forward.11} parent=11 // pred_check
        %p224 = pneg %p157
      $region18: #{transformer_forward.11} parent=11 // pred_check_branch
        %226 = sbr.rel (%p224) target = $region20
      $region19: #{transformer_forward.11} parent=11 // pred_region
        _
      $region20: #{transformer_forward.11} parent=11 // pred_fallthru
        _
      // Predicated region
      $region21: #{transformer_forward.11} parent=11 // pred_check
        %p227 = pneg %p178
      $region22: #{transformer_forward.11} parent=11 // pred_check_branch
        %229 = sbr.rel (%p227) target = $region24
      $region23: #{transformer_forward.11} parent=11 // pred_region
        _
      $region24: #{transformer_forward.11} parent=11 // pred_fallthru
        _
    $region12: #{transformer_forward.11} parent=5 // pred_fallthru
      _
    %p230 = scmp.lt.s32.totalorder %s12, 4
    // Predicated region
    $region25: #{transformer_forward.11} parent=5 // pred_check
      %p231 = pneg %p230
    $region26: #{transformer_forward.11} parent=5 // pred_check_branch
      %233 = sbr.rel (%p231) target = $region28
    $region27: #{transformer_forward.11} parent=5 // pred_region
      // Predicated region
      $region29: #{transformer_forward.11} parent=27 // pred_check
        %p234 = pneg %p55
      $region30: #{transformer_forward.11} parent=27 // pred_check_branch
        %236 = sbr.rel (%p234) target = $region32
      $region31: #{transformer_forward.11} parent=27 // pred_region
        %p237 = scmp.lt.s32.totalorder %s19, 1
        %s238 = scalar_select %p237, %s19, 1
        %p239 = scmp.lt.s32.totalorder %s21, 1
        %s240 = scalar_select %p239, %s21, 1
        %p241 = scmp.lt.s32.totalorder %s20, 0
        %s242 = scalar_select %p241, %s20, 0
        %s243 = sadd.s32 %s242, %s240
        %s244 = smul.addr %s238, 2
        %s245 = sadd.s32 %s243, %s244
        %s246 = smul.addr %s245, 4
        %s247 = scalar_lea.vmem %s0, %s246
      $region32: #{transformer_forward.11} parent=27 // pred_fallthru
        _
      // Predicated region
      $region33: #{transformer_forward.11} parent=27 // pred_check
        %p248 = pneg %p81
      $region34: #{transformer_forward.11} parent=27 // pred_check_branch
        %250 = sbr.rel (%p248) target = $region36
      $region35: #{transformer_forward.11} parent=27 // pred_region
        %p251 = scmp.lt.s32.totalorder %s21, 1
        %s252 = scalar_select %p251, %s21, 1
        %s253 = smul.addr %s252, 2
        %s254 = smul.addr %s253, 4
        %s255 = scalar_lea.vmem %s1, %s254
      $region36: #{transformer_forward.11} parent=27 // pred_fallthru
        _
      // Predicated region
      $region37: #{transformer_forward.11} parent=27 // pred_check
        %p256 = pneg %p130
      $region38: #{transformer_forward.11} parent=27 // pred_check_branch
        %258 = sbr.rel (%p256) target = $region40
      $region39: #{transformer_forward.11} parent=27 // pred_region
        %p259 = scmp.lt.s32.totalorder %s19, 1
        %s260 = scalar_select %p259, %s19, 1
        %p261 = scmp.lt.s32.totalorder %s20, 0
        %s262 = scalar_select %p261, %s20, 0
        %s263 = sadd.s32 %s262, %s260
        %s264 = smul.addr %s263, 4
        %s265 = scalar_lea.vmem %s3, %s264
      $region40: #{transformer_forward.11} parent=27 // pred_fallthru
        _
    $region28: #{transformer_forward.11} parent=5 // pred_fallthru
      _
    %p266 = scmp.le.s32.totalorder 1, %s12
    %p267 = scmp.lt.s32.totalorder %s12, 5
    %p268 = pnand %p266, %p267
    %p269 = pneg %p268
    // Predicated region
    $region41: #{transformer_forward.11} parent=5 // pred_check
      _
    $region42: #{transformer_forward.11} parent=5 // pred_check_branch
      %271 = sbr.rel (%p268) target = $region44
    $region43: #{transformer_forward.11} parent=5 // pred_region
      %s272 = ssub.s32 %s12, 1
      %p273 = scmp.lt.s32.totalorder %s22, 1
      %s274 = scalar_select %p273, %s22, 1
      %p275 = scmp.lt.s32.totalorder %s24, 1
      %s276 = scalar_select %p275, %s24, 1
      %p277 = scmp.lt.s32.totalorder %s23, 0
      %s278 = scalar_select %p277, %s23, 0
      %s279 = sadd.s32 %s278, %s276
      %s280 = smul.addr %s274, 2
      %s281 = sadd.s32 %s279, %s280
      %s282 = smul.addr %s281, 4
      %s283 = scalar_lea.vmem %s0, %s282
      %p284 = pneg %p61
      %p285 = pneg %p58
      %p286 = scmp.lt.s32.totalorder %s24, 1
      %s287 = scalar_select %p286, %s24, 1
      %s288 = smul.addr %s287, 2
      %s289 = smul.addr %s288, 4
      %s290 = scalar_lea.vmem %s1, %s289
      %p291 = pneg %p87
      %p292 = pneg %p84
      %p293 = pneg %p108
      %p294 = pneg %p105
      %p295 = scmp.lt.s32.totalorder %s22, 1
      %s296 = scalar_select %p295, %s22, 1
      %p297 = scmp.lt.s32.totalorder %s23, 0
      %s298 = scalar_select %p297, %s23, 0
      %s299 = sadd.s32 %s298, %s296
      %s300 = smul.addr %s299, 4
      %s301 = scalar_lea.vmem %s3, %s300
      %p302 = pneg %p136
      %p303 = pneg %p133
      %p304 = pneg %p157
      %p305 = pneg %p154
      %p306 = pneg %p178
      %p307 = pneg %p175
      %p308 = pneg %p206
      %p309 = pneg %p203
      %p310 = scmp.lt.s32.totalorder %s22, 1
      %s311 = scalar_select %p310, %s22, 1
      %p312 = scmp.lt.s32.totalorder %s23, 0
      %s313 = scalar_select %p312, %s23, 0
      %s314 = sadd.s32 %s313, %s311
      %s315 = smul.addr %s314, 4
      %s316 = scalar_lea.vmem %s6, %s315
      %p317 = scmp.lt.s32.totalorder %s22, 1
      %s318 = scalar_select %p317, %s22, 1
      %p319 = scmp.lt.s32.totalorder %s24, 1
      %s320 = scalar_select %p319, %s24, 1
      %p321 = scmp.lt.s32.totalorder %s23, 0
      %s322 = scalar_select %p321, %s23, 0
      %s323 = sadd.s32 %s322, %s320
      %s324 = smul.addr %s318, 2
      %s325 = sadd.s32 %s323, %s324
      %s326 = smul.addr %s325, 4
      %s327 = scalar_lea.vmem %s0, %s326
      %p328 = scmp.lt.s32.totalorder %s24, 1
      %s329 = scalar_select %p328, %s24, 1
      %s330 = smul.addr %s329, 2
      %s331 = smul.addr %s330, 4
      %s332 = scalar_lea.vmem %s1, %s331
      %p333 = scmp.lt.s32.totalorder %s22, 1
      %s334 = scalar_select %p333, %s22, 1
      %p335 = scmp.lt.s32.totalorder %s23, 0
      %s336 = scalar_select %p335, %s23, 0
      %s337 = sadd.s32 %s336, %s334
      %s338 = smul.addr %s337, 4
      %s339 = scalar_lea.vmem %s3, %s338
      %p340 = scmp.lt.s32.totalorder %s22, 1
      %s341 = scalar_select %p340, %s22, 1
      %p342 = scmp.lt.s32.totalorder %s23, 0
      %s343 = scalar_select %p342, %s23, 0
      %s344 = sadd.s32 %s343, %s341
      %s345 = smul.addr %s344, 4
      %s346 = scalar_lea.vmem %s6, %s345
      %p348 = scmp.eq.s32.totalorder %s24, 0
      // Predicated region
      $region45: #{transformer_forward.11} parent=43 // pred_check
        %p349 = pneg %p348
      $region46: #{transformer_forward.11} parent=43 // pred_check_branch
        %351 = sbr.rel (%p349) target = $region48
      $region47: #{transformer_forward.11} parent=43 // pred_region
        %vm352 = vcmask 261120
        %353 = vst.msk [vmem:[#allocation2] sm:$0xff] %vm352, 0.0
      $region48: #{transformer_forward.11} parent=43 // pred_fallthru
        _
      %v354 = vld [vmem:[#allocation2] sm:$0xff]
      %v355 = vld [vmem:[%s327] sm:$0xf]
      %v356 = vld [vmem:[%s332] sm:$0xf]
      %v357 = vld [vmem:[%s332 + $0x4] sm:$0xf]
      %v360 = vunpack.c.l.b16 %v356
      %v361 = vunpack.c.l.b16 %v357
      %v362 = vpack.c.b16 %v361, %v360
      %vm364 = vcmask 130048
      %v366 = vsel %vm364, %v355, 0
      %368 = vmatprep.subr.bf16.mxu0 0
      %369 = vmatpush1.bf16.msra.mxu0 %v362
      %370 = vmatprep.subr.bf16.mxu0 0
      %371 = vmatpush1.bf16.msra.mxu0 0
      %372 = vmatprep.subr.bf16.mxu0 0
      %373 = vmatpush1.bf16.msra.mxu0 0
      %374 = vmatprep.subr.bf16.mxu0 0
      %375 = vmatpush1.bf16.msra.mxu0 0
      %376 = vmatprep.subr.bf16.mxu0 0
      %377 = vmatpush1.bf16.msra.mxu0 0
      %378 = vmatprep.subr.bf16.mxu0 0
      %379 = vmatpush1.bf16.msra.mxu0 0
      %380 = vmatprep.subr.bf16.mxu0 0
      %381 = vmatpush1.bf16.msra.mxu0 0
      %382 = vmatprep.subr.bf16.mxu0 0
      %383 = vmatpush1.bf16.msra.mxu0 0
      %384 = vmatprep.subr.bf16.mxu0 0
      %385 = vmatpush1.bf16.msra.mxu0 0
      %386 = vmatprep.subr.bf16.mxu0 0
      %387 = vmatpush1.bf16.msra.mxu0 0
      %388 = vmatprep.subr.bf16.mxu0 0
      %389 = vmatpush1.bf16.msra.mxu0 0
      %390 = vmatprep.subr.bf16.mxu0 0
      %391 = vmatpush1.bf16.msra.mxu0 0
      %392 = vmatprep.subr.bf16.mxu0 0
      %393 = vmatpush1.bf16.msra.mxu0 0
      %394 = vmatprep.subr.bf16.mxu0 0
      %395 = vmatpush1.bf16.msra.mxu0 0
      %396 = vmatprep.subr.bf16.mxu0 0
      %397 = vmatpush1.bf16.msra.mxu0 0
      %398 = vmatprep.subr.bf16.mxu0 0
      %399 = vmatpush1.bf16.msra.mxu0 0
      %400 = vmatprep.mubr.bf16.mxu0 0
      %401 = vmatmul.mubr.bf16.gmra.mrb[0].mxu0 %v366
      %v402 = vpop.f32.mrb[0].mxu0
      %v403 = vadd.f32 0.0, %v402
      %v404 = vpop.f32.mrb[0].mxu0
      %v405 = vpop.f32.mrb[0].mxu0
      %v406 = vpop.f32.mrb[0].mxu0
      %407 = vdwg.mxu0
      %v408 = vadd.f32 %v354, %v403
      %vm409 = vcmask 261120
      %410 = vst.msk [vmem:[#allocation2] sm:$0xff] %vm409, %v408
      %p411 = scmp.eq.s32.totalorder %s24, 1
      // Predicated region
      $region49: #{transformer_forward.11} parent=43 // pred_check
        %p412 = pneg %p411
      $region50: #{transformer_forward.11} parent=43 // pred_check_branch
        %414 = sbr.rel (%p412) target = $region52
      $region51: #{transformer_forward.11} parent=43 // pred_region
        %v415 = vld [vmem:[#allocation2] sm:$0xff]
        %v416 = vld [vmem:[%s2] sm:$0x1]
        %v418 = vlaneseq
        %v419 = vshrl.u32 %v418, 7
        %v420 = vsub.s32 0, %v419
        %v421 = vrot.slane %v416, %v420
        %v423 = vadd.f32 %v415, %v421
        %v424 = vld [vmem:[%s339] sm:$0xf]
        %v425 = vunpack.c.l.bf16 %v424
        %v426 = vadd.f32 %v423, %v425
        %v427 = vsel %vm409, %v426, 0.0
        %428 = vadd.xlane.f32.xlu0 %v427
        %v429 = vpop.xlane.xlu0 %428
        %v430 = vrcp.pop 32.0
        %v431 = vmul.f32 %v429, %v430
        %v432 = vsub.f32 %v426, %v431
        %v433 = vmul.f32 %v432, %v432
        %v434 = vsel %vm409, %v433, 0.0
        %435 = vadd.xlane.f32.xlu0 %v434
        %v436 = vpop.xlane.xlu0 %435
        %v437 = vmul.f32 %v436, %v430
        %v438 = vadd.f32 %v437, 1e-05
        %v439 = vrsqrt.pop %v438
        %v440 = vmul.f32 %v432, %v439
        %v441 = vld [vmem:[%s4] sm:$0x1]
        %v443 = vlaneseq
        %v444 = vshrl.u32 %v443, 7
        %v445 = vsub.s32 0, %v444
        %v446 = vrot.slane %v441, %v445
        %v448 = vmul.f32 %v440, %v446
        %v449 = vld [vmem:[%s5] sm:$0x1]
        %v451 = vlaneseq
        %v452 = vshrl.u32 %v451, 7
        %v453 = vsub.s32 0, %v452
        %v454 = vrot.slane %v449, %v453
        %v456 = vadd.f32 %v448, %v454
        %v457 = vpack.c.bf16 %v456, %v456
        %vm458 = vcmask 257024
        %459 = vst.msk [vmem:[%s346] sm:$0xf] %vm458, %v457
      $region52: #{transformer_forward.11} parent=43 // pred_fallthru
        _
      %p460 = scmp.lt.s32.totalorder %s22, 1
      %s461 = scalar_select %p460, %s22, 1
      %p462 = scmp.lt.s32.totalorder %s23, 0
      %s463 = scalar_select %p462, %s23, 0
      %s464 = sadd.s32 %s463, %s461
      %s465 = smul.addr %s464, 4
      %s466 = scalar_lea.vmem %s6, %s465
      // Predicated region
      $region53: #{transformer_forward.11} parent=43 // pred_check
        %p467 = pneg %p203
      $region54: #{transformer_forward.11} parent=43 // pred_check_branch
        %469 = sbr.rel (%p467) target = $region56
      $region55: #{transformer_forward.11} parent=43 // pred_region
        _
      $region56: #{transformer_forward.11} parent=43 // pred_fallthru
        _
    $region44: #{transformer_forward.11} parent=5 // pred_fallthru
      _
    %p470 = scmp.le.s32.totalorder 2, %s12
    // Predicated region
    $region57: #{transformer_forward.11} parent=5 // pred_check
      %p471 = pneg %p470
    $region58: #{transformer_forward.11} parent=5 // pred_check_branch
      %473 = sbr.rel (%p471) target = $region60
    $region59: #{transformer_forward.11} parent=5 // pred_region
      %s474 = ssub.s32 %s12, 2
      // Predicated region
      $region61: #{transformer_forward.11} parent=59 // pred_check
        %p475 = pneg %p209
      $region62: #{transformer_forward.11} parent=59 // pred_check_branch
        %477 = sbr.rel (%p475) target = $region64
      $region63: #{transformer_forward.11} parent=59 // pred_region
        %p478 = scmp.lt.s32.totalorder %s25, 1
        %s479 = scalar_select %p478, %s25, 1
        %p480 = scmp.lt.s32.totalorder %s26, 0
        %s481 = scalar_select %p480, %s26, 0
        %s482 = sadd.s32 %s481, %s479
        %s483 = smul.addr %s482, 4
        %s484 = scalar_lea.vmem %s6, %s483
      $region64: #{transformer_forward.11} parent=59 // pred_fallthru
        _
    $region60: #{transformer_forward.11} parent=5 // pred_fallthru
      _
  $region6: #{transformer_forward.11} parent=0 // loop_footer
    %s16 = sadd.s32 1, %s12
  $region7: #{transformer_forward.11} parent=0 // loop_footer_branch
    %11 = sbr.rel target = $region3
  $region8: #{transformer_forward.11} parent=0 // loop_exit
    _

// kernel: transformer_forward.12
$region0: #{transformer_forward.12}
  #allocation0 [shape = 'u32[]', space=smem, size = 0x4, offset = 0x4, fixed_abs, tag = 'smem constant byte address 0x4 - core index']
  #allocation1 [shape = 'u32[144,128]{1,0:T(1,128)}', space=vmem, size = 0x12000, scoped, tag = 'internal scratch']
  #allocation2 [shape = 'f32[8,32]{1,0:T(8,128)}', space=vmem, size = 0x1000, scoped, tag = 'scratch operand']
  %s0 = inlined_call_operand.vmem [shape: bf16[2,8,32], index: 0, kind: input, shape index: {}]
  %s1 = inlined_call_operand.vmem [shape: bf16[32,64], index: 1, kind: input, shape index: {}]
  %s2 = inlined_call_operand.vmem [shape: f32[1,64], index: 2, kind: input, shape index: {}]
  %s3 = inlined_call_operand.vmem [shape: bf16[64,32], index: 3, kind: input, shape index: {}]
  %s4 = inlined_call_operand.vmem [shape: f32[1,32], index: 4, kind: input, shape index: {}]
  %s5 = inlined_call_operand.vmem [shape: f32[1,32], index: 5, kind: input, shape index: {}]
  %s6 = inlined_call_operand.vmem [shape: f32[1,32], index: 6, kind: input, shape index: {}]
  %s7 = inlined_call_operand.vmem [shape: bf16[2,8,32], index: 7, kind: output, shape index: {}]
  %s8 = sld [smem:[#allocation0]]
  $region69: #{transformer_forward.12} parent=0
    _
  %s10 = ssub.s32 1, %s8
  %s11 = scalar_select 0, %s10, %s8
  loop: start=0, step=1, limit=4
  $region2: #{transformer_forward.12} parent=0 // loop_pre_header
    _
  $region3: #{transformer_forward.12} parent=0 // loop_header
    %s13 = sphi 0, %s17
    %p14 = scmp.ge.s32.totalorder %s13, 4
    %s20 = sphi 0, %s39
    %s21 = sphi 0, %s35
    %s22 = sphi 0, %s31
    %s23 = sphi 0, %s20
    %s24 = sphi 0, %s21
    %s25 = sphi 0, %s22
    %s26 = sphi 0, %s23
    %s27 = sphi 0, %s24
    %s28 = sphi 0, %s25
    %s44 = sphi 0, %s46
    %s47 = sphi 0, %s44
    %s48 = sphi 0, %s47
    %s64 = sphi 0, %s48
    %s70 = sphi 0, %s72
    %s73 = sphi 0, %s70
    %s74 = sphi 0, %s73
    %s90 = sphi 0, %s74
    %s96 = sphi 0, %s98
    %s99 = sphi 0, %s96
    %s100 = sphi 0, %s99
    %s116 = sphi 0, %s100
    %s122 = sphi 0, %s124
    %s125 = sphi 0, %s122
    %s126 = sphi 0, %s125
    %s142 = sphi 0, %s126
    %s146 = sphi 0, %s146
    %s148 = sphi 0, %s146
    %s149 = sphi 0, %s148
    %s163 = sphi 0, %s149
    %s167 = sphi 0, %s167
    %s169 = sphi 0, %s167
    %s170 = sphi 0, %s169
    %s184 = sphi 0, %s170
    %s188 = sphi 0, %s188
    %s190 = sphi 0, %s188
    %s191 = sphi 0, %s190
    %s205 = sphi 0, %s191
    %s213 = sphi 0, %s215
    %s216 = sphi 0, %s213
    %s217 = sphi 0, %s216
    %s233 = sphi 0, %s217
  $region4: #{transformer_forward.12} parent=0 // loop_header_branch
    %16 = sbr.rel (%p14) target = $region8
  $region5: #{transformer_forward.12} parent=0 // loop_body
    %s18 = ssub.s32 %s13, 1
    %s19 = ssub.s32 %s13, 2
    %s29 = sadd.s32 1, %s22
    %p30 = scmp.ge.s32.totalorder %s29, 1
    %s31 = scalar_select %p30, 0, %s29
    %s32 = sadd.s32 1, %s21
    %s33 = scalar_select %p30, %s32, %s21
    %p34 = scmp.ge.s32.totalorder %s33, 1
    %s35 = scalar_select %p34, 0, %s33
    %s36 = sadd.s32 1, %s20
    %s37 = scalar_select %p34, %s36, %s20
    %p38 = scmp.ge.s32.totalorder %s37, 2
    %s39 = scalar_select %p38, 0, %s37
    %s40 = ssub.s32 %s20, %s39
    %s41 = ssub.s32 %s21, %s35
    %s42 = sor.u32 %s40, %s41
    %p43 = scmp.eq.s32.totalorder %s42, 0
    %s45 = sadd.s32 %s44, 1
    %s46 = scalar_select %p43, %s44, %s45
    %p49 = pneg %p43
    %p50 = scmp.eq.s32.totalorder %s13, 1
    %p51 = por %p49, %p50
    %p52 = scmp.ne.s32.totalorder %s44, %s47
    %p53 = scmp.eq.s32.totalorder %s13, 0
    %p54 = por %p52, %p53
    %p55 = scmp.ne.s32.totalorder %s44, %s47
    %p56 = scmp.eq.s32.totalorder %s18, 1
    %p57 = por %p55, %p56
    %p58 = scmp.ne.s32.totalorder %s47, %s48
    %p59 = scmp.eq.s32.totalorder %s18, 0
    %p60 = por %p58, %p59
    %p61 = scmp.ne.s32.totalorder %s47, %s48
    %p62 = scmp.eq.s32.totalorder %s19, 1
    %p63 = por %p61, %p62
    %p65 = scmp.ne.s32.totalorder %s48, %s64
    %p66 = scmp.eq.s32.totalorder %s19, 0
    %p67 = por %p65, %p66
    %s68 = ssub.s32 %s22, %s31
    %p69 = scmp.eq.s32.totalorder %s68, 0
    %s71 = sadd.s32 %s70, 1
    %s72 = scalar_select %p69, %s70, %s71
    %p75 = pneg %p69
    %p76 = scmp.eq.s32.totalorder %s13, 1
    %p77 = por %p75, %p76
    %p78 = scmp.ne.s32.totalorder %s70, %s73
    %p79 = scmp.eq.s32.totalorder %s13, 0
    %p80 = por %p78, %p79
    %p81 = scmp.ne.s32.totalorder %s70, %s73
    %p82 = scmp.eq.s32.totalorder %s18, 1
    %p83 = por %p81, %p82
    %p84 = scmp.ne.s32.totalorder %s73, %s74
    %p85 = scmp.eq.s32.totalorder %s18, 0
    %p86 = por %p84, %p85
    %p87 = scmp.ne.s32.totalorder %s73, %s74
    %p88 = scmp.eq.s32.totalorder %s19, 1
    %p89 = por %p87, %p88
    %p91 = scmp.ne.s32.totalorder %s74, %s90
    %p92 = scmp.eq.s32.totalorder %s19, 0
    %p93 = por %p91, %p92
    %s94 = ssub.s32 %s22, %s31
    %p95 = scmp.eq.s32.totalorder %s94, 0
    %s97 = sadd.s32 %s96, 1
    %s98 = scalar_select %p95, %s96, %s97
    %p101 = pneg %p95
    %p102 = scmp.eq.s32.totalorder %s13, 1
    %p103 = por %p101, %p102
    %p104 = scmp.ne.s32.totalorder %s96, %s99
    %p105 = scmp.eq.s32.totalorder %s13, 0
    %p106 = por %p104, %p105
    %p107 = scmp.ne.s32.totalorder %s96, %s99
    %p108 = scmp.eq.s32.totalorder %s18, 1
    %p109 = por %p107, %p108
    %p110 = scmp.ne.s32.totalorder %s99, %s100
    %p111 = scmp.eq.s32.totalorder %s18, 0
    %p112 = por %p110, %p111
    %p113 = scmp.ne.s32.totalorder %s99, %s100
    %p114 = scmp.eq.s32.totalorder %s19, 1
    %p115 = por %p113, %p114
    %p117 = scmp.ne.s32.totalorder %s100, %s116
    %p118 = scmp.eq.s32.totalorder %s19, 0
    %p119 = por %p117, %p118
    %s120 = ssub.s32 %s22, %s31
    %p121 = scmp.eq.s32.totalorder %s120, 0
    %s123 = sadd.s32 %s122, 1
    %s124 = scalar_select %p121, %s122, %s123
    %p127 = pneg %p121
    %p128 = scmp.eq.s32.totalorder %s13, 1
    %p129 = por %p127, %p128
    %p130 = scmp.ne.s32.totalorder %s122, %s125
    %p131 = scmp.eq.s32.totalorder %s13, 0
    %p132 = por %p130, %p131
    %p133 = scmp.ne.s32.totalorder %s122, %s125
    %p134 = scmp.eq.s32.totalorder %s18, 1
    %p135 = por %p133, %p134
    %p136 = scmp.ne.s32.totalorder %s125, %s126
    %p137 = scmp.eq.s32.totalorder %s18, 0
    %p138 = por %p136, %p137
    %p139 = scmp.ne.s32.totalorder %s125, %s126
    %p140 = scmp.eq.s32.totalorder %s19, 1
    %p141 = por %p139, %p140
    %p143 = scmp.ne.s32.totalorder %s126, %s142
    %p144 = scmp.eq.s32.totalorder %s19, 0
    %p145 = por %p143, %p144
    %s147 = sadd.s32 %s146, 1
    %p150 = scmp.eq.s32.totalorder %s13, 1
    %p151 = scmp.ne.s32.totalorder %s146, %s148
    %p152 = scmp.eq.s32.totalorder %s13, 0
    %p153 = por %p151, %p152
    %p154 = scmp.ne.s32.totalorder %s146, %s148
    %p155 = scmp.eq.s32.totalorder %s18, 1
    %p156 = por %p154, %p155
    %p157 = scmp.ne.s32.totalorder %s148, %s149
    %p158 = scmp.eq.s32.totalorder %s18, 0
    %p159 = por %p157, %p158
    %p160 = scmp.ne.s32.totalorder %s148, %s149
    %p161 = scmp.eq.s32.totalorder %s19, 1
    %p162 = por %p160, %p161
    %p164 = scmp.ne.s32.totalorder %s149, %s163
    %p165 = scmp.eq.s32.totalorder %s19, 0
    %p166 = por %p164, %p165
    %s168 = sadd.s32 %s167, 1
    %p171 = scmp.eq.s32.totalorder %s13, 1
    %p172 = scmp.ne.s32.totalorder %s167, %s169
    %p173 = scmp.eq.s32.totalorder %s13, 0
    %p174 = por %p172, %p173
    %p175 = scmp.ne.s32.totalorder %s167, %s169
    %p176 = scmp.eq.s32.totalorder %s18, 1
    %p177 = por %p175, %p176
    %p178 = scmp.ne.s32.totalorder %s169, %s170
    %p179 = scmp.eq.s32.totalorder %s18, 0
    %p180 = por %p178, %p179
    %p181 = scmp.ne.s32.totalorder %s169, %s170
    %p182 = scmp.eq.s32.totalorder %s19, 1
    %p183 = por %p181, %p182
    %p185 = scmp.ne.s32.totalorder %s170, %s184
    %p186 = scmp.eq.s32.totalorder %s19, 0
    %p187 = por %p185, %p186
    %s189 = sadd.s32 %s188, 1
    %p192 = scmp.eq.s32.totalorder %s13, 1
    %p193 = scmp.ne.s32.totalorder %s188, %s190
    %p194 = scmp.eq.s32.totalorder %s13, 0
    %p195 = por %p193, %p194
    %p196 = scmp.ne.s32.totalorder %s188, %s190
    %p197 = scmp.eq.s32.totalorder %s18, 1
    %p198 = por %p196, %p197
    %p199 = scmp.ne.s32.totalorder %s190, %s191
    %p200 = scmp.eq.s32.totalorder %s18, 0
    %p201 = por %p199, %p200
    %p202 = scmp.ne.s32.totalorder %s190, %s191
    %p203 = scmp.eq.s32.totalorder %s19, 1
    %p204 = por %p202, %p203
    %p206 = scmp.ne.s32.totalorder %s191, %s205
    %p207 = scmp.eq.s32.totalorder %s19, 0
    %p208 = por %p206, %p207
    %s209 = ssub.s32 %s20, %s39
    %s210 = ssub.s32 %s21, %s35
    %s211 = sor.u32 %s209, %s210
    %p212 = scmp.eq.s32.totalorder %s211, 0
    %s214 = sadd.s32 %s213, 1
    %s215 = scalar_select %p212, %s213, %s214
    %p218 = pneg %p212
    %p219 = scmp.eq.s32.totalorder %s13, 1
    %p220 = por %p218, %p219
    %p221 = scmp.ne.s32.totalorder %s213, %s216
    %p222 = scmp.eq.s32.totalorder %s13, 0
    %p223 = por %p221, %p222
    %p224 = scmp.ne.s32.totalorder %s213, %s216
    %p225 = scmp.eq.s32.totalorder %s18, 1
    %p226 = por %p224, %p225
    %p227 = scmp.ne.s32.totalorder %s216, %s217
    %p228 = scmp.eq.s32.totalorder %s18, 0
    %p229 = por %p227, %p228
    %p230 = scmp.ne.s32.totalorder %s216, %s217
    %p231 = scmp.eq.s32.totalorder %s19, 1
    %p232 = por %p230, %p231
    %p234 = scmp.ne.s32.totalorder %s217, %s233
    %p235 = scmp.eq.s32.totalorder %s19, 0
    %p236 = por %p234, %p235
    %p237 = scmp.le.s32.totalorder 1, %s13
    %p238 = scmp.lt.s32.totalorder %s13, 3
    %p239 = pnand %p237, %p238
    %p240 = pneg %p239
    // Predicated region
    $region9: #{transformer_forward.12} parent=5 // pred_check
      _
    $region10: #{transformer_forward.12} parent=5 // pred_check_branch
      %242 = sbr.rel (%p239) target = $region12
    $region11: #{transformer_forward.12} parent=5 // pred_region
      %s243 = ssub.s32 %s13, 1
      // Predicated region
      $region13: #{transformer_forward.12} parent=11 // pred_check
        %p244 = pneg %p86
      $region14: #{transformer_forward.12} parent=11 // pred_check_branch
        %246 = sbr.rel (%p244) target = $region16
      $region15: #{transformer_forward.12} parent=11 // pred_region
        %p247 = scmp.lt.s32.totalorder %s25, 0
        %s248 = scalar_select %p247, %s25, 0
        %s249 = smul.addr %s248, 4
        %s250 = scalar_lea.vmem %s1, %s249
      $region16: #{transformer_forward.12} parent=11 // pred_fallthru
        _
      // Predicated region
      $region17: #{transformer_forward.12} parent=11 // pred_check
        %p251 = pneg %p112
      $region18: #{transformer_forward.12} parent=11 // pred_check_branch
        %253 = sbr.rel (%p251) target = $region20
      $region19: #{transformer_forward.12} parent=11 // pred_region
        %p254 = scmp.lt.s32.totalorder %s25, 0
        %s255 = scalar_select %p254, %s25, 0
        %s256 = scalar_lea.vmem %s2, %s255
      $region20: #{transformer_forward.12} parent=11 // pred_fallthru
        _
      // Predicated region
      $region21: #{transformer_forward.12} parent=11 // pred_check
        %p257 = pneg %p138
      $region22: #{transformer_forward.12} parent=11 // pred_check_branch
        %259 = sbr.rel (%p257) target = $region24
      $region23: #{transformer_forward.12} parent=11 // pred_region
        %s260 = smul.u32 8, %s25
        %p261 = scmp.lt.s32.totalorder %s260, 7
        %s262 = scalar_select %p261, %s260, 7
        %s263 = smul.addr %s262, 4
        %s264 = scalar_lea.vmem %s3, %s263
        %s265 = smul.u32 8, %s25
      $region24: #{transformer_forward.12} parent=11 // pred_fallthru
        _
      // Predicated region
      $region25: #{transformer_forward.12} parent=11 // pred_check
        %p266 = pneg %p159
      $region26: #{transformer_forward.12} parent=11 // pred_check_branch
        %268 = sbr.rel (%p266) target = $region28
      $region27: #{transformer_forward.12} parent=11 // pred_region
        _
      $region28: #{transformer_forward.12} parent=11 // pred_fallthru
        _
      // Predicated region
      $region29: #{transformer_forward.12} parent=11 // pred_check
        %p269 = pneg %p180
      $region30: #{transformer_forward.12} parent=11 // pred_check_branch
        %271 = sbr.rel (%p269) target = $region32
      $region31: #{transformer_forward.12} parent=11 // pred_region
        _
      $region32: #{transformer_forward.12} parent=11 // pred_fallthru
        _
      // Predicated region
      $region33: #{transformer_forward.12} parent=11 // pred_check
        %p272 = pneg %p201
      $region34: #{transformer_forward.12} parent=11 // pred_check_branch
        %274 = sbr.rel (%p272) target = $region36
      $region35: #{transformer_forward.12} parent=11 // pred_region
        _
      $region36: #{transformer_forward.12} parent=11 // pred_fallthru
        _
    $region12: #{transformer_forward.12} parent=5 // pred_fallthru
      _
    %p275 = scmp.lt.s32.totalorder %s13, 2
    // Predicated region
    $region37: #{transformer_forward.12} parent=5 // pred_check
      %p276 = pneg %p275
    $region38: #{transformer_forward.12} parent=5 // pred_check_branch
      %278 = sbr.rel (%p276) target = $region40
    $region39: #{transformer_forward.12} parent=5 // pred_region
      // Predicated region
      $region41: #{transformer_forward.12} parent=39 // pred_check
        %p279 = pneg %p54
      $region42: #{transformer_forward.12} parent=39 // pred_check_branch
        %281 = sbr.rel (%p279) target = $region44
      $region43: #{transformer_forward.12} parent=39 // pred_region
        %p282 = scmp.lt.s32.totalorder %s20, 1
        %s283 = scalar_select %p282, %s20, 1
        %p284 = scmp.lt.s32.totalorder %s21, 0
        %s285 = scalar_select %p284, %s21, 0
        %s286 = sadd.s32 %s285, %s283
        %s287 = smul.addr %s286, 4
        %s288 = scalar_lea.vmem %s0, %s287
      $region44: #{transformer_forward.12} parent=39 // pred_fallthru
        _
    $region40: #{transformer_forward.12} parent=5 // pred_fallthru
      _
    %p289 = scmp.le.s32.totalorder 1, %s13
    %p290 = scmp.lt.s32.totalorder %s13, 3
    %p291 = pnand %p289, %p290
    %p292 = pneg %p291
    // Predicated region
    $region45: #{transformer_forward.12} parent=5 // pred_check
      _
    $region46: #{transformer_forward.12} parent=5 // pred_check_branch
      %294 = sbr.rel (%p291) target = $region48
    $region47: #{transformer_forward.12} parent=5 // pred_region
      %s295 = ssub.s32 %s13, 1
      %p296 = scmp.lt.s32.totalorder %s23, 1
      %s297 = scalar_select %p296, %s23, 1
      %p298 = scmp.lt.s32.totalorder %s24, 0
      %s299 = scalar_select %p298, %s24, 0
      %s300 = sadd.s32 %s299, %s297
      %s301 = smul.addr %s300, 4
      %s302 = scalar_lea.vmem %s0, %s301
      %p303 = pneg %p60
      %p304 = pneg %p57
      %p305 = scmp.lt.s32.totalorder %s25, 0
      %s306 = scalar_select %p305, %s25, 0
      %s307 = smul.addr %s306, 4
      %s308 = scalar_lea.vmem %s1, %s307
      %p309 = pneg %p86
      %p310 = pneg %p83
      %p311 = scmp.lt.s32.totalorder %s25, 0
      %s312 = scalar_select %p311, %s25, 0
      %s313 = scalar_lea.vmem %s2, %s312
      %p314 = pneg %p112
      %p315 = pneg %p109
      %s316 = smul.u32 8, %s25
      %p317 = scmp.lt.s32.totalorder %s316, 7
      %s318 = scalar_select %p317, %s316, 7
      %s319 = smul.addr %s318, 4
      %s320 = scalar_lea.vmem %s3, %s319
      %p321 = pneg %p138
      %p322 = pneg %p135
      %p323 = pneg %p159
      %p324 = pneg %p156
      %p325 = pneg %p180
      %p326 = pneg %p177
      %p327 = pneg %p201
      %p328 = pneg %p198
      %p329 = pneg %p229
      %p330 = pneg %p226
      %p331 = scmp.lt.s32.totalorder %s23, 1
      %s332 = scalar_select %p331, %s23, 1
      %p333 = scmp.lt.s32.totalorder %s24, 0
      %s334 = scalar_select %p333, %s24, 0
      %s335 = sadd.s32 %s334, %s332
      %s336 = smul.addr %s335, 4
      %s337 = scalar_lea.vmem %s7, %s336
      %p338 = scmp.lt.s32.totalorder %s23, 1
      %s339 = scalar_select %p338, %s23, 1
      %p340 = scmp.lt.s32.totalorder %s24, 0
      %s341 = scalar_select %p340, %s24, 0
      %s342 = sadd.s32 %s341, %s339
      %s343 = smul.addr %s342, 4
      %s344 = scalar_lea.vmem %s0, %s343
      %p345 = scmp.lt.s32.totalorder %s25, 0
      %s346 = scalar_select %p345, %s25, 0
      %s347 = smul.addr %s346, 4
      %s348 = scalar_lea.vmem %s1, %s347
      %p349 = scmp.lt.s32.totalorder %s25, 0
      %s350 = scalar_select %p349, %s25, 0
      %s351 = scalar_lea.vmem %s2, %s350
      %s352 = smul.u32 8, %s25
      %p353 = scmp.lt.s32.totalorder %s352, 7
      %s354 = scalar_select %p353, %s352, 7
      %s355 = smul.addr %s354, 4
      %s356 = scalar_lea.vmem %s3, %s355
      %s357 = smul.u32 8, %s25
      %p358 = scmp.lt.s32.totalorder %s23, 1
      %s359 = scalar_select %p358, %s23, 1
      %p360 = scmp.lt.s32.totalorder %s24, 0
      %s361 = scalar_select %p360, %s24, 0
      %s362 = sadd.s32 %s361, %s359
      %s363 = smul.addr %s362, 4
      %s364 = scalar_lea.vmem %s7, %s363
      %v366 = vld [vmem:[%s344] sm:$0xf]
      %p367 = scmp.eq.s32.totalorder %s25, 0
      // Predicated region
      $region49: #{transformer_forward.12} parent=47 // pred_check
        %p368 = pneg %p367
      $region50: #{transformer_forward.12} parent=47 // pred_check_branch
        %370 = sbr.rel (%p368) target = $region52
      $region51: #{transformer_forward.12} parent=47 // pred_region
        %vm371 = vcmask 261120
        %372 = vst.msk [vmem:[#allocation2] sm:$0xff] %vm371, 0.0
      $region52: #{transformer_forward.12} parent=47 // pred_fallthru
        _
      %v373 = vld [vmem:[%s348] sm:$0xf]
      %v374 = vld [vmem:[%s348 + $0x4] sm:$0xf]
      %v375 = vld [vmem:[%s348 + $0x8] sm:$0xf]
      %v376 = vld [vmem:[%s348 + $0xc] sm:$0xf]
      %v377 = vld [vmem:[%s351] sm:$0x1]
      %v379 = vlaneseq
      %v380 = vshrl.u32 %v379, 7
      %v381 = vsub.s32 0, %v380
      %v382 = vrot.slane %v377, %v381
      %v388 = vunpack.c.l.b16 %v373
      %v389 = vunpack.c.l.b16 %v374
      %v390 = vunpack.c.l.b16 %v375
      %v391 = vunpack.c.l.b16 %v376
      %v392 = vpack.c.b16 %v389, %v388
      %v393 = vpack.c.b16 %v391, %v390
      %vm396 = vcmask 261120
      %v398 = vsel %vm396, %v366, 0
      %400 = vmatprep.subr.bf16.mxu0 0
      %401 = vmatpush1.bf16.msra.mxu0 %v392
      %402 = vmatprep.subr.bf16.mxu0 0
      %403 = vmatpush1.bf16.msra.mxu0 %v393
      %404 = vmatprep.subr.bf16.mxu0 0
      %405 = vmatpush1.bf16.msra.mxu0 0
      %406 = vmatprep.subr.bf16.mxu0 0
      %407 = vmatpush1.bf16.msra.mxu0 0
      %408 = vmatprep.subr.bf16.mxu0 0
      %409 = vmatpush1.bf16.msra.mxu0 0
      %410 = vmatprep.subr.bf16.mxu0 0
      %411 = vmatpush1.bf16.msra.mxu0 0
      %412 = vmatprep.subr.bf16.mxu0 0
      %413 = vmatpush1.bf16.msra.mxu0 0
      %414 = vmatprep.subr.bf16.mxu0 0
      %415 = vmatpush1.bf16.msra.mxu0 0
      %416 = vmatprep.subr.bf16.mxu0 0
      %417 = vmatpush1.bf16.msra.mxu0 0
      %418 = vmatprep.subr.bf16.mxu0 0
      %419 = vmatpush1.bf16.msra.mxu0 0
      %420 = vmatprep.subr.bf16.mxu0 0
      %421 = vmatpush1.bf16.msra.mxu0 0
      %422 = vmatprep.subr.bf16.mxu0 0
      %423 = vmatpush1.bf16.msra.mxu0 0
      %424 = vmatprep.subr.bf16.mxu0 0
      %425 = vmatpush1.bf16.msra.mxu0 0
      %426 = vmatprep.subr.bf16.mxu0 0
      %427 = vmatpush1.bf16.msra.mxu0 0
      %428 = vmatprep.subr.bf16.mxu0 0
      %429 = vmatpush1.bf16.msra.mxu0 0
      %430 = vmatprep.subr.bf16.mxu0 0
      %431 = vmatpush1.bf16.msra.mxu0 0
      %432 = vmatprep.mubr.bf16.mxu0 0
      %433 = vmatmul.mubr.bf16.gmra.mrb[0].mxu0 %v398
      %v434 = vpop.f32.mrb[0].mxu0
      %v435 = vadd.f32 %v382, %v434
      %v436 = vpop.f32.mrb[0].mxu0
      %v437 = vpop.f32.mrb[0].mxu0
      %v438 = vpop.f32.mrb[0].mxu0
      %439 = vdwg.mxu0
      %v440 = vmax.f32 %v435, 0.0
      %v441 = vld [vmem:[#allocation2] sm:$0xff]
      %v442 = vpack.c.bf16 %v440, %v440
      %v443 = vld [vmem:[%s356] sm:$0xf]
      %v444 = vld [vmem:[%s356 + $0x4] sm:$0xf]
      %v445 = vld [vmem:[%s356 + $0x8] sm:$0xf]
      %v446 = vld [vmem:[%s356 + $0xc] sm:$0xf]
      %v447 = vld [vmem:[%s356 + $0x10] sm:$0xf]
      %v448 = vld [vmem:[%s356 + $0x14] sm:$0xf]
      %v449 = vld [vmem:[%s356 + $0x18] sm:$0xf]
      %v450 = vld [vmem:[%s356 + $0x1c] sm:$0xf]
      %v459 = vunpack.c.l.b16 %v443
      %v460 = vunpack.c.l.b16 %v444
      %v461 = vunpack.c.l.b16 %v445
      %v462 = vunpack.c.l.b16 %v446
      %v463 = vunpack.c.l.b16 %v447
      %v464 = vunpack.c.l.b16 %v448
      %v465 = vunpack.c.l.b16 %v449
      %v466 = vunpack.c.l.b16 %v450
      %v467 = vpack.c.b16 %v460, %v459
      %v468 = vpack.c.b16 %v462, %v461
      %v469 = vpack.c.b16 %v464, %v463
      %v470 = vpack.c.b16 %v466, %v465
      %vm475 = vcmask 523264
      %v477 = vsel %vm475, %v442, 0
      %479 = vmatprep.subr.bf16.mxu0 0
      %480 = vmatpush1.bf16.msra.mxu0 %v467
      %481 = vmatprep.subr.bf16.mxu0 0
      %482 = vmatpush1.bf16.msra.mxu0 %v468
      %483 = vmatprep.subr.bf16.mxu0 0
      %484 = vmatpush1.bf16.msra.mxu0 %v469
      %485 = vmatprep.subr.bf16.mxu0 0
      %486 = vmatpush1.bf16.msra.mxu0 %v470
      %487 = vmatprep.subr.bf16.mxu0 0
      %488 = vmatpush1.bf16.msra.mxu0 0
      %489 = vmatprep.subr.bf16.mxu0 0
      %490 = vmatpush1.bf16.msra.mxu0 0
      %491 = vmatprep.subr.bf16.mxu0 0
      %492 = vmatpush1.bf16.msra.mxu0 0
      %493 = vmatprep.subr.bf16.mxu0 0
      %494 = vmatpush1.bf16.msra.mxu0 0
      %495 = vmatprep.subr.bf16.mxu0 0
      %496 = vmatpush1.bf16.msra.mxu0 0
      %497 = vmatprep.subr.bf16.mxu0 0
      %498 = vmatpush1.bf16.msra.mxu0 0
      %499 = vmatprep.subr.bf16.mxu0 0
      %500 = vmatpush1.bf16.msra.mxu0 0
      %501 = vmatprep.subr.bf16.mxu0 0
      %502 = vmatpush1.bf16.msra.mxu0 0
      %503 = vmatprep.subr.bf16.mxu0 0
      %504 = vmatpush1.bf16.msra.mxu0 0
      %505 = vmatprep.subr.bf16.mxu0 0
      %506 = vmatpush1.bf16.msra.mxu0 0
      %507 = vmatprep.subr.bf16.mxu0 0
      %508 = vmatpush1.bf16.msra.mxu0 0
      %509 = vmatprep.subr.bf16.mxu0 0
      %510 = vmatpush1.bf16.msra.mxu0 0
      %511 = vmatprep.mubr.bf16.mxu0 0
      %512 = vmatmul.mubr.bf16.gmra.mrb[0].mxu0 %v477
      %v513 = vpop.f32.mrb[0].mxu0
      %v514 = vadd.f32 0.0, %v513
      %v515 = vpop.f32.mrb[0].mxu0
      %v516 = vpop.f32.mrb[0].mxu0
      %v517 = vpop.f32.mrb[0].mxu0
      %518 = vdwg.mxu0
      %v519 = vadd.f32 %v441, %v514
      %520 = vst.msk [vmem:[#allocation2] sm:$0xff] %vm396, %v519
      // Predicated region
      $region53: #{transformer_forward.12} parent=47 // pred_check
        %p521 = pneg %p367
      $region54: #{transformer_forward.12} parent=47 // pred_check_branch
        %523 = sbr.rel (%p521) target = $region56
      $region55: #{transformer_forward.12} parent=47 // pred_region
        %v524 = vld [vmem:[#allocation2] sm:$0xff]
        %v525 = vld [vmem:[%s4] sm:$0x1]
        %v527 = vlaneseq
        %v528 = vshrl.u32 %v527, 7
        %v529 = vsub.s32 0, %v528
        %v530 = vrot.slane %v525, %v529
        %v532 = vadd.f32 %v524, %v530
        %v533 = vunpack.c.l.bf16 %v366
        %v534 = vadd.f32 %v532, %v533
        %v535 = vsel %vm396, %v534, 0.0
        %536 = vadd.xlane.f32.xlu0 %v535
        %v537 = vpop.xlane.xlu0 %536
        %v538 = vrcp.pop 32.0
        %v539 = vmul.f32 %v537, %v538
        %v540 = vsub.f32 %v534, %v539
        %v541 = vmul.f32 %v540, %v540
        %v542 = vsel %vm396, %v541, 0.0
        %543 = vadd.xlane.f32.xlu0 %v542
        %v544 = vpop.xlane.xlu0 %543
        %v545 = vmul.f32 %v544, %v538
        %v546 = vadd.f32 %v545, 1e-05
        %v547 = vrsqrt.pop %v546
        %v548 = vmul.f32 %v540, %v547
        %v549 = vld [vmem:[%s5] sm:$0x1]
        %v551 = vlaneseq
        %v552 = vshrl.u32 %v551, 7
        %v553 = vsub.s32 0, %v552
        %v554 = vrot.slane %v549, %v553
        %v556 = vmul.f32 %v548, %v554
        %v557 = vld [vmem:[%s6] sm:$0x1]
        %v559 = vlaneseq
        %v560 = vshrl.u32 %v559, 7
        %v561 = vsub.s32 0, %v560
        %v562 = vrot.slane %v557, %v561
        %v564 = vadd.f32 %v556, %v562
        %v565 = vpack.c.bf16 %v564, %v564
        %vm566 = vcmask 257024
        %567 = vst.msk [vmem:[%s364] sm:$0xf] %vm566, %v565
      $region56: #{transformer_forward.12} parent=47 // pred_fallthru
        _
      %p568 = scmp.lt.s32.totalorder %s23, 1
      %s569 = scalar_select %p568, %s23, 1
      %p570 = scmp.lt.s32.totalorder %s24, 0
      %s571 = scalar_select %p570, %s24, 0
      %s572 = sadd.s32 %s571, %s569
      %s573 = smul.addr %s572, 4
      %s574 = scalar_lea.vmem %s7, %s573
      // Predicated region
      $region57: #{transformer_forward.12} parent=47 // pred_check
        %p575 = pneg %p226
      $region58: #{transformer_forward.12} parent=47 // pred_check_branch
        %577 = sbr.rel (%p575) target = $region60
      $region59: #{transformer_forward.12} parent=47 // pred_region
        _
      $region60: #{transformer_forward.12} parent=47 // pred_fallthru
        _
    $region48: #{transformer_forward.12} parent=5 // pred_fallthru
      _
    %p578 = scmp.le.s32.totalorder 2, %s13
    // Predicated region
    $region61: #{transformer_forward.12} parent=5 // pred_check
      %p579 = pneg %p578
    $region62: #{transformer_forward.12} parent=5 // pred_check_branch
      %581 = sbr.rel (%p579) target = $region64
    $region63: #{transformer_forward.12} parent=5 // pred_region
      %s582 = ssub.s32 %s13, 2
      // Predicated region
      $region65: #{transformer_forward.12} parent=63 // pred_check
        %p583 = pneg %p232
      $region66: #{transformer_forward.12} parent=63 // pred_check_branch
        %585 = sbr.rel (%p583) target = $region68
      $region67: #{transformer_forward.12} parent=63 // pred_region
        %p586 = scmp.lt.s32.totalorder %s26, 1
        %s587 = scalar_select %p586, %s26, 1
        %p588 = scmp.lt.s32.totalorder %s27, 0
        %s589 = scalar_select %p588, %s27, 0
        %s590 = sadd.s32 %s589, %s587
        %s591 = smul.addr %s590, 4
        %s592 = scalar_lea.vmem %s7, %s591
      $region68: #{transformer_forward.12} parent=63 // pred_fallthru
        _
    $region64: #{transformer_forward.12} parent=5 // pred_fallthru
      _
  $region6: #{transformer_forward.12} parent=0 // loop_footer
    %s17 = sadd.s32 1, %s13
  $region7: #{transformer_forward.12} parent=0 // loop_footer_branch
    %12 = sbr.rel target = $region3
  $region8: #{transformer_forward.12} parent=0 // loop_exit
    _

// kernel: transformer_forward.17
$region0: #{transformer_forward.17}
  #allocation0 [shape = 'u32[]', space=smem, size = 0x4, offset = 0x4, fixed_abs, tag = 'smem constant byte address 0x4 - core index']
  #allocation1 [shape = 'u32[144,128]{1,0:T(1,128)}', space=vmem, size = 0x12000, scoped, tag = 'internal scratch']
  #allocation2 [shape = 'f32[16,128]{1,0:T(8,128)}', space=vmem, size = 0x2000, scoped, tag = 'scratch operand']
  %s0 = inlined_call_operand.vmem [shape: bf16[16,32], index: 0, kind: input, shape index: {}]
  %s1 = inlined_call_operand.vmem [shape: bf16[32,128], index: 1, kind: input, shape index: {}]
  %s2 = inlined_call_operand.vmem [shape: f32[1,128], index: 2, kind: input, shape index: {}]
  %s3 = inlined_call_operand.hbm [shape: f32[16,128], index: 3, kind: output, shape index: {}]
  %s4 = sld [smem:[#allocation0]]
  $region30: #{transformer_forward.17} parent=0
    _
  %s6 = ssub.s32 1, %s4
  %s7 = scalar_select 0, %s6, %s4
  $region1: #{transformer_forward.17} parent=0
    #allocation3 [shape = 'u8[8192]{0}', space=vmem, size = 0x2000, scoped, tag = 'output window, operand 0, single buffered']
    #allocation4 [shape = 's32[1]{0}', space=sflag, size = 0x4, scoped, tag = 'scoped memory for transformer_forward.17']
    %8 = vsyncpa [#allocation4], 0
    // Predicated region
    $region2: #{transformer_forward.17} parent=1 // pred_check
      _
    $region3: #{transformer_forward.17} parent=1 // pred_check_branch
      %10 = sbr.rel (0) target = $region5
    $region4: #{transformer_forward.17} parent=1 // pred_region
      _
    $region5: #{transformer_forward.17} parent=1 // pred_fallthru
      _
    // Predicated region
    $region6: #{transformer_forward.17} parent=1 // pred_check
      _
    $region7: #{transformer_forward.17} parent=1 // pred_check_branch
      %12 = sbr.rel (0) target = $region9
    $region8: #{transformer_forward.17} parent=1 // pred_region
      _
    $region9: #{transformer_forward.17} parent=1 // pred_fallthru
      _
    // Predicated region
    $region10: #{transformer_forward.17} parent=1 // pred_check
      _
    $region11: #{transformer_forward.17} parent=1 // pred_check_branch
      %14 = sbr.rel (0) target = $region13
    $region12: #{transformer_forward.17} parent=1 // pred_region
      _
    $region13: #{transformer_forward.17} parent=1 // pred_fallthru
      _
    %p16 = scmp.eq.s32.totalorder 0, 0
    // Predicated region
    $region14: #{transformer_forward.17} parent=1 // pred_check
      %p17 = pneg %p16
    $region15: #{transformer_forward.17} parent=1 // pred_check_branch
      %19 = sbr.rel (%p17) target = $region17
    $region16: #{transformer_forward.17} parent=1 // pred_region
      %20 = vst [vmem:[#allocation2] sm:$0xff] 0.0
      %21 = vst [vmem:[#allocation2 + $0x8] sm:$0xff] 0.0
    $region17: #{transformer_forward.17} parent=1 // pred_fallthru
      _
    %v22 = vld [vmem:[#allocation2] sm:$0xff]
    %v23 = vld [vmem:[#allocation2 + $0x8] sm:$0xff]
    %v24 = vld [vmem:[%s0] sm:$0xf]
    %v25 = vld [vmem:[%s0 + $0x4] sm:$0xf]
    %v26 = vld [vmem:[%s1] sm:$0xf]
    %v27 = vld [vmem:[%s1 + $0x4] sm:$0xf]
    %v28 = vld [vmem:[%s1 + $0x8] sm:$0xf]
    %v29 = vld [vmem:[%s1 + $0xc] sm:$0xf]
    %v32 = vunpack.c.l.b16 %v24
    %v33 = vunpack.c.l.b16 %v25
    %v34 = vpack.c.b16 %v33, %v32
    %v39 = vunpack.c.l.b16 %v26
    %v40 = vunpack.c.l.b16 %v27
    %v41 = vunpack.c.l.b16 %v28
    %v42 = vunpack.c.l.b16 %v29
    %v43 = vpack.c.b16 %v40, %v39
    %v44 = vpack.c.b16 %v42, %v41
    %vm47 = vcmask 261120
    %v49 = vsel %vm47, %v34, 0
    %51 = vmatprep.subr.bf16.mxu0 0
    %52 = vmatpush1.bf16.msra.mxu0 %v43
    %53 = vmatprep.subr.bf16.mxu0 0
    %54 = vmatpush1.bf16.msra.mxu0 %v44
    %55 = vmatprep.subr.bf16.mxu0 0
    %56 = vmatpush1.bf16.msra.mxu0 0
    %57 = vmatprep.subr.bf16.mxu0 0
    %58 = vmatpush1.bf16.msra.mxu0 0
    %59 = vmatprep.subr.bf16.mxu0 0
    %60 = vmatpush1.bf16.msra.mxu0 0
    %61 = vmatprep.subr.bf16.mxu0 0
    %62 = vmatpush1.bf16.msra.mxu0 0
    %63 = vmatprep.subr.bf16.mxu0 0
    %64 = vmatpush1.bf16.msra.mxu0 0
    %65 = vmatprep.subr.bf16.mxu0 0
    %66 = vmatpush1.bf16.msra.mxu0 0
    %67 = vmatprep.subr.bf16.mxu0 0
    %68 = vmatpush1.bf16.msra.mxu0 0
    %69 = vmatprep.subr.bf16.mxu0 0
    %70 = vmatpush1.bf16.msra.mxu0 0
    %71 = vmatprep.subr.bf16.mxu0 0
    %72 = vmatpush1.bf16.msra.mxu0 0
    %73 = vmatprep.subr.bf16.mxu0 0
    %74 = vmatpush1.bf16.msra.mxu0 0
    %75 = vmatprep.subr.bf16.mxu0 0
    %76 = vmatpush1.bf16.msra.mxu0 0
    %77 = vmatprep.subr.bf16.mxu0 0
    %78 = vmatpush1.bf16.msra.mxu0 0
    %79 = vmatprep.subr.bf16.mxu0 0
    %80 = vmatpush1.bf16.msra.mxu0 0
    %81 = vmatprep.subr.bf16.mxu0 0
    %82 = vmatpush1.bf16.msra.mxu0 0
    %83 = vmatprep.mubr.bf16.mxu0 0
    %84 = vmatmul.mubr.bf16.gmra.mrb[0].mxu0 %v49
    %v85 = vpop.f32.mrb[0].mxu0
    %v86 = vadd.f32 0.0, %v85
    %v87 = vpop.f32.mrb[0].mxu0
    %v88 = vpop.f32.mrb[0].mxu0
    %v89 = vadd.f32 0.0, %v88
    %v90 = vpop.f32.mrb[0].mxu0
    %91 = vdwg.mxu0
    %v92 = vadd.f32 %v22, %v86
    %v93 = vadd.f32 %v23, %v89
    %94 = vst [vmem:[#allocation2] sm:$0xff] %v92
    %95 = vst [vmem:[#allocation2 + $0x8] sm:$0xff] %v93
    // Predicated region
    $region18: #{transformer_forward.17} parent=1 // pred_check
      %p96 = pneg %p16
    $region19: #{transformer_forward.17} parent=1 // pred_check_branch
      %98 = sbr.rel (%p96) target = $region21
    $region20: #{transformer_forward.17} parent=1 // pred_region
      %v99 = vld [vmem:[#allocation2] sm:$0xff]
      %v100 = vld [vmem:[#allocation2 + $0x8] sm:$0xff]
      %v101 = vld [vmem:[%s2] sm:$0x1]
      %v103 = vlaneseq
      %v104 = vshrl.u32 %v103, 7
      %v105 = vsub.s32 0, %v104
      %v106 = vrot.slane %v101, %v105
      %v108 = vadd.f32 %v99, %v106
      %v109 = vadd.f32 %v100, %v106
      %110 = vst [vmem:[#allocation3] sm:$0xff] %v108
      %111 = vst [vmem:[#allocation3 + $0x8] sm:$0xff] %v109
    $region21: #{transformer_forward.17} parent=1 // pred_fallthru
      _
    // Predicated region
    $region22: #{transformer_forward.17} parent=1 // pred_check
      _
    $region23: #{transformer_forward.17} parent=1 // pred_check_branch
      %113 = sbr.rel (0) target = $region25
    $region24: #{transformer_forward.17} parent=1 // pred_region
      %s115 = ssub.s32 256, 256
      %116 = vsyncadd [#allocation4], %s115
      %s117 = sshll.u32 [#allocation3], 4
      %s118 = int_to_ptr.vmem [resolvable:$true] %s117
      %123 = dma.vmem_to_hbm [thread:$0]  %s118, 256, %s3, [#allocation4], 128, 128, 8
    $region25: #{transformer_forward.17} parent=1 // pred_fallthru
      _
    // Predicated region
    $region26: #{transformer_forward.17} parent=1 // pred_check
      _
    $region27: #{transformer_forward.17} parent=1 // pred_check_branch
      %125 = sbr.rel (0) target = $region29
    $region28: #{transformer_forward.17} parent=1 // pred_region
      %126 = dma.done [#allocation4], 256
    $region29: #{transformer_forward.17} parent=1 // pred_fallthru
      _
    %127 = vsyncpa [#allocation4], 1

</llo_original>
